<compile_context>
chip_gen: v7x
topology: tpu7x:2x2x1
jax: 0.10.0
libtpu: 0.0.40
codegen_flags: <defaults>
</compile_context>

<pallas_src>
from functools import partial

import jax
import jax.numpy as jnp
from jax.experimental import pallas as pl
from jax.experimental.pallas import tpu as pltpu

NUM_POS = 8            # self.num_positions
IN_CHANNELS = 512      # self.in_channels
LANE = 128
BF16_SUBLANE = 16      # bf16 packs 16 sublanes per vreg
NUM_HEAD_GROUPS = 2    # heads split across 2 grid steps (2 TCs on v7x)


def _round_up(x, m):
    return ((x + m - 1) // m) * m


# ----------------------------------------------------------------------------
# Pallas kernel: one group of per-position linear heads per grid step
# ----------------------------------------------------------------------------
def _heads_kernel(p_ref, w_ref, b_ref, o_ref):
    # p_ref: (B_pad, G*Cin)    bf16  pooled features, positions of this group
    #                                concatenated along lanes (lane-dense)
    # w_ref: (G, Cin, C_pad)   bf16  per-position weights (torch weight.T, padded)
    # b_ref: (G, 1, C_pad)     f32   per-position biases (padded)
    # o_ref: (B_pad, G*C_pad)  f32   logits, position-major along lanes
    g, cin, c_pad = w_ref.shape
    for pos in range(g):                       # static unroll inside the body
        x = p_ref[:, pos * cin:(pos + 1) * cin]              # (B_pad, Cin) bf16
        acc = jnp.dot(x, w_ref[pos], preferred_element_type=jnp.float32)  # MXU
        # 128-aligned, 128-multiple lane window -> full unmasked vector stores
        o_ref[:, pos * c_pad:(pos + 1) * c_pad] = acc + b_ref[pos]


def plate_heads(pooled_flat, W_p, b_p):
    """pooled_flat: (B_pad, P*Cin) bf16, W_p: (P, Cin, C_pad) bf16,
    b_p: (P, 1, C_pad) f32 -> (B_pad, P*C_pad) f32 logits (padded)."""
    B_pad = pooled_flat.shape[0]
    P, Cin, C_pad = W_p.shape
    G = P // NUM_HEAD_GROUPS

    return pl.pallas_call(
        _heads_kernel,
        out_shape=jax.ShapeDtypeStruct((B_pad, P * C_pad), jnp.float32),
        grid=(NUM_HEAD_GROUPS,),
        in_specs=[
            pl.BlockSpec((B_pad, G * Cin), lambda i: (0, i)),
            pl.BlockSpec((G, Cin, C_pad), lambda i: (i, 0, 0)),
            pl.BlockSpec((G, 1, C_pad), lambda i: (i, 0, 0)),
        ],
        out_specs=pl.BlockSpec((B_pad, G * C_pad), lambda i: (0, i)),
        compiler_params=pltpu.CompilerParams(
            dimension_semantics=("parallel",)),   # 2 TCs on v7x, cheap elsewhere
    )(pooled_flat, W_p, b_p)


# ----------------------------------------------------------------------------
# Head parameter init + one-time preprocessing (hoisted out of per-call path)
# ----------------------------------------------------------------------------
def init_heads(key, num_pos, in_ch, num_classes):
    kw, kb = jax.random.split(key)
    bound = 1.0 / (in_ch ** 0.5)
    # stored (pos, in, out) = torch Linear weight transposed; synthetic init
    W = jax.random.uniform(kw, (num_pos, in_ch, num_classes), jnp.float32, -bound, bound)
    b = jax.random.uniform(kb, (num_pos, num_classes), jnp.float32, -bound, bound)
    return W, b


def prep_heads(W, b):
    """Cast/pad once at init; the jitted forward receives the padded tensors."""
    P, Cin, C = W.shape
    C_pad = _round_up(max(C, LANE), LANE)
    W_p = jnp.pad(W.astype(jnp.bfloat16), ((0, 0), (0, 0), (0, C_pad - C)))
    b_p = jnp.pad(b.astype(jnp.float32), ((0, 0), (0, C_pad - C)))[:, None, :]
    # TODO(synk): int8 weight quantization (per-head scale) for v5e/v6e would
    # halve the dominant weight DMA; not portable to v7x (no integer MXU).
    return W_p, b_p


# ----------------------------------------------------------------------------
# resnet18 feature extractor (children()[:-2]) in plain JAX, eval-mode BN.
# TODO(synk): backbone conv stack stays in plain JAX (lax.conv); porting the
# full resnet18 convolutions to Pallas is out of scope for this kernel.
# ----------------------------------------------------------------------------
def _conv2d(x, w, stride, padding):
    return jax.lax.conv_general_dilated(
        x, w, window_strides=(stride, stride),
        padding=[(padding, padding), (padding, padding)],
        dimension_numbers=("NCHW", "OIHW", "NCHW"))


def _bn(x, scale, bias, mean, var, eps=1e-5):
    inv = scale / jnp.sqrt(var + eps)
    return x * inv[None, :, None, None] + (bias - mean * inv)[None, :, None, None]


def _maxpool_3x3_s2_p1(x):
    return jax.lax.reduce_window(
        x, -jnp.inf, jax.lax.max,
        window_dimensions=(1, 1, 3, 3), window_strides=(1, 1, 2, 2),
        padding=((0, 0), (0, 0), (1, 1), (1, 1)))


def _conv_init(key, out_c, in_c, kh, kw):
    fan_in = in_c * kh * kw
    std = (2.0 / fan_in) ** 0.5
    return jax.random.normal(key, (out_c, in_c, kh, kw), jnp.float32) * std


def _bn_init(c):
    return dict(scale=jnp.ones((c,), jnp.float32), bias=jnp.zeros((c,), jnp.float32),
                mean=jnp.zeros((c,), jnp.float32), var=jnp.ones((c,), jnp.float32))


def init_resnet18(key):
    keys = iter(jax.random.split(key, 32))
    params = {"conv1": _conv_init(next(keys), 64, 3, 7, 7), "bn1": _bn_init(64)}
    stage_specs = [(64, 64, 1), (64, 128, 2), (128, 256, 2), (256, 512, 2)]
    layers = []
    for in_c, out_c, stride in stage_specs:
        blocks = []
        for bidx in range(2):
            s = stride if bidx == 0 else 1
            ic = in_c if bidx == 0 else out_c
            blk = dict(
                conv1=_conv_init(next(keys), out_c, ic, 3, 3), bn1=_bn_init(out_c),
                conv2=_conv_init(next(keys), out_c, out_c, 3, 3), bn2=_bn_init(out_c))
            if s != 1 or ic != out_c:
                blk["down_conv"] = _conv_init(next(keys), out_c, ic, 1, 1)
                blk["down_bn"] = _bn_init(out_c)
            blocks.append(blk)
        layers.append(blocks)
    params["layers"] = layers
    return params


def _basic_block(x, blk, stride):
    identity = x
    out = _conv2d(x, blk["conv1"], stride, 1)
    out = jax.nn.relu(_bn(out, **blk["bn1"]))
    out = _conv2d(out, blk["conv2"], 1, 1)
    out = _bn(out, **blk["bn2"])
    if "down_conv" in blk:
        identity = _bn(_conv2d(x, blk["down_conv"], stride, 0), **blk["down_bn"])
    return jax.nn.relu(out + identity)


def feature_extractor(x, params):
    x = _conv2d(x, params["conv1"], 2, 3)
    x = jax.nn.relu(_bn(x, **params["bn1"]))
    x = _maxpool_3x3_s2_p1(x)
    for li, blocks in enumerate(params["layers"]):
        for bi, blk in enumerate(blocks):
            stride = 2 if (li > 0 and bi == 0) else 1
            x = _basic_block(x, blk, stride)
    return x                                            # (B, 512, H/32, W/32)


# ----------------------------------------------------------------------------
# Full forward: resnet trunk -> (fused XLA adaptive pool) -> Pallas heads
# ----------------------------------------------------------------------------
@partial(jax.jit, static_argnames=("num_classes",))
def plate_classifier_forward(x, backbone_params, W_p, b_p, *, num_classes):
    f = feature_extractor(x, backbone_params)           # (B, 512, Hf, Wf)
    B, Cin, Hf, Wf = f.shape
    # AdaptiveAvgPool2d((1, 8)) with Wf % 8 == 0: bin `pos` averages the
    # Hf*(Wf//8) window.  One fused XLA reduction reads the feature map once
    # and writes only (B, Cin, 8); no full feature-map transpose in HBM.
    # TODO(synk): PyTorch handles Wf % 8 != 0 with uneven bins; unsupported here.
    assert Wf % NUM_POS == 0, "feature width must be a multiple of 8"
    sub = Wf // NUM_POS
    pooled = f.reshape(B, Cin, Hf, NUM_POS, sub).mean(axis=(2, 4))   # (B, Cin, P) f32
    # Tiny re-layout (fuses into one small op): -> lane-dense (B_pad, P*Cin) bf16
    P_pad_B = _round_up(max(B, BF16_SUBLANE), BF16_SUBLANE)
    pooled_flat = jnp.swapaxes(pooled, 1, 2).reshape(B, NUM_POS * Cin)
    pooled_flat = jnp.pad(pooled_flat.astype(jnp.bfloat16),
                          ((0, P_pad_B - B), (0, 0)))                # (B_pad, P*Cin)

    out = plate_heads(pooled_flat, W_p, b_p)             # (B_pad, P*C_pad) f32
    C_pad = W_p.shape[-1]
    # Free minor-dim split + cheap slice: padded rows/cols never escape the jit.
    return out.reshape(P_pad_B, NUM_POS, C_pad)[:B, :, :num_classes]


if __name__ == "__main__":
    num_classes = 36
    key = jax.random.PRNGKey(0)
    k_bb, k_head, k_x = jax.random.split(key, 3)

    backbone_params = init_resnet18(k_bb)
    W, b = init_heads(k_head, NUM_POS, IN_CHANNELS, num_classes)
    W_p, b_p = prep_heads(W, b)          # one-time pad/cast, outside jit path

    # small plate-shaped input: (B=2, C=3, H=64, W=256) -> features (2, 512, 2, 8)
    x = jax.random.normal(k_x, (2, 3, 64, 256), jnp.float32)

    out = plate_classifier_forward(x, backbone_params, W_p, b_p,
                                   num_classes=num_classes)
    out = jax.block_until_ready(out)
    assert out.shape == (2, NUM_POS, num_classes), out.shape
    assert bool(jnp.all(jnp.isfinite(out)))
    print("KERNEL_OK")
</pallas_src>

<mosaic_0001>
module attributes {stable_mosaic.version = 11 : i64} {
  func.func @_heads_kernel(%arg0: i32, %arg1: memref<16x2048xbf16, #tpu.memory_space<vmem>>, %arg2: memref<4x512x128xbf16, #tpu.memory_space<vmem>>, %arg3: memref<4x1x128xf32, #tpu.memory_space<vmem>>, %arg4: memref<16x512xf32, #tpu.memory_space<vmem>>) attributes {dimension_semantics = [#tpu.dimension_semantics<parallel>], iteration_bounds = array<i64: 2>, scalar_prefetch = 0 : i64, scratch_operands = 0 : i64, tpu.core_type = #tpu.core_type<tc>, window_params = [{transform_indices = @transform_0, window_bounds = array<i64: 16, 2048>}, {transform_indices = @transform_1, window_bounds = array<i64: 4, 512, 128>}, {transform_indices = @transform_2, window_bounds = array<i64: 4, 1, 128>}, {transform_indices = @transform_3, window_bounds = array<i64: 16, 512>}]} {
    %c0 = arith.constant 0 : index
    %c0_0 = arith.constant 0 : index
    %0 = vector.load %arg1[%c0, %c0_0] : memref<16x2048xbf16, #tpu.memory_space<vmem>>, vector<16x512xbf16>
    %c0_1 = arith.constant 0 : index
    %c0_2 = arith.constant 0 : index
    %c0_3 = arith.constant 0 : index
    %1 = vector.load %arg2[%c0_1, %c0_2, %c0_3] : memref<4x512x128xbf16, #tpu.memory_space<vmem>>, vector<1x512x128xbf16>
    %2 = vector.shape_cast %1 : vector<1x512x128xbf16> to vector<512x128xbf16>
    %cst = arith.constant dense<0.000000e+00> : vector<16x128xf32>
    %3 = tpu.matmul %0, %2, %cst {dimension_numbers = #tpu.dot_dimension_numbers<[1], [0], [0], [1], [0, 0, 1, 1], [], []>} : vector<16x512xbf16>, vector<512x128xbf16>, vector<16x128xf32> -> vector<16x128xf32>
    %c0_4 = arith.constant 0 : index
    %c0_5 = arith.constant 0 : index
    %c0_6 = arith.constant 0 : index
    %4 = vector.load %arg3[%c0_4, %c0_5, %c0_6] : memref<4x1x128xf32, #tpu.memory_space<vmem>>, vector<1x1x128xf32>
    %5 = vector.shape_cast %4 : vector<1x1x128xf32> to vector<1x128xf32>
    %6 = vector.broadcast %5 : vector<1x128xf32> to vector<16x128xf32>
    %7 = arith.addf %3, %6 : vector<16x128xf32>
    %c0_7 = arith.constant 0 : index
    %c0_8 = arith.constant 0 : index
    %8 = vector.load %arg4[%c0_7, %c0_8] : memref<16x512xf32, #tpu.memory_space<vmem>>, vector<16x128xf32>
    tpu.vector_store %arg4[%c0_7, %c0_8], %7 {strides = array<i32>} : memref<16x512xf32, #tpu.memory_space<vmem>>, vector<16x128xf32>,
    %c0_9 = arith.constant 0 : index
    %c512 = arith.constant 512 : index
    %9 = vector.load %arg1[%c0_9, %c512] : memref<16x2048xbf16, #tpu.memory_space<vmem>>, vector<16x512xbf16>
    %c1 = arith.constant 1 : index
    %c0_10 = arith.constant 0 : index
    %c0_11 = arith.constant 0 : index
    %10 = vector.load %arg2[%c1, %c0_10, %c0_11] : memref<4x512x128xbf16, #tpu.memory_space<vmem>>, vector<1x512x128xbf16>
    %11 = vector.shape_cast %10 : vector<1x512x128xbf16> to vector<512x128xbf16>
    %cst_12 = arith.constant dense<0.000000e+00> : vector<16x128xf32>
    %12 = tpu.matmul %9, %11, %cst_12 {dimension_numbers = #tpu.dot_dimension_numbers<[1], [0], [0], [1], [0, 0, 1, 1], [], []>} : vector<16x512xbf16>, vector<512x128xbf16>, vector<16x128xf32> -> vector<16x128xf32>
    %c1_13 = arith.constant 1 : index
    %c0_14 = arith.constant 0 : index
    %c0_15 = arith.constant 0 : index
    %13 = vector.load %arg3[%c1_13, %c0_14, %c0_15] : memref<4x1x128xf32, #tpu.memory_space<vmem>>, vector<1x1x128xf32>
    %14 = vector.shape_cast %13 : vector<1x1x128xf32> to vector<1x128xf32>
    %15 = vector.broadcast %14 : vector<1x128xf32> to vector<16x128xf32>
    %16 = arith.addf %12, %15 : vector<16x128xf32>
    %c0_16 = arith.constant 0 : index
    %c128 = arith.constant 128 : index
    %17 = vector.load %arg4[%c0_16, %c128] : memref<16x512xf32, #tpu.memory_space<vmem>>, vector<16x128xf32>
    tpu.vector_store %arg4[%c0_16, %c128], %16 {strides = array<i32>} : memref<16x512xf32, #tpu.memory_space<vmem>>, vector<16x128xf32>,
    %c0_17 = arith.constant 0 : index
    %c1024 = arith.constant 1024 : index
    %18 = vector.load %arg1[%c0_17, %c1024] : memref<16x2048xbf16, #tpu.memory_space<vmem>>, vector<16x512xbf16>
    %c2 = arith.constant 2 : index
    %c0_18 = arith.constant 0 : index
    %c0_19 = arith.constant 0 : index
    %19 = vector.load %arg2[%c2, %c0_18, %c0_19] : memref<4x512x128xbf16, #tpu.memory_space<vmem>>, vector<1x512x128xbf16>
    %20 = vector.shape_cast %19 : vector<1x512x128xbf16> to vector<512x128xbf16>
    %cst_20 = arith.constant dense<0.000000e+00> : vector<16x128xf32>
    %21 = tpu.matmul %18, %20, %cst_20 {dimension_numbers = #tpu.dot_dimension_numbers<[1], [0], [0], [1], [0, 0, 1, 1], [], []>} : vector<16x512xbf16>, vector<512x128xbf16>, vector<16x128xf32> -> vector<16x128xf32>
    %c2_21 = arith.constant 2 : index
    %c0_22 = arith.constant 0 : index
    %c0_23 = arith.constant 0 : index
    %22 = vector.load %arg3[%c2_21, %c0_22, %c0_23] : memref<4x1x128xf32, #tpu.memory_space<vmem>>, vector<1x1x128xf32>
    %23 = vector.shape_cast %22 : vector<1x1x128xf32> to vector<1x128xf32>
    %24 = vector.broadcast %23 : vector<1x128xf32> to vector<16x128xf32>
    %25 = arith.addf %21, %24 : vector<16x128xf32>
    %c0_24 = arith.constant 0 : index
    %c256 = arith.constant 256 : index
    %26 = vector.load %arg4[%c0_24, %c256] : memref<16x512xf32, #tpu.memory_space<vmem>>, vector<16x128xf32>
    tpu.vector_store %arg4[%c0_24, %c256], %25 {strides = array<i32>} : memref<16x512xf32, #tpu.memory_space<vmem>>, vector<16x128xf32>,
    %c0_25 = arith.constant 0 : index
    %c1536 = arith.constant 1536 : index
    %27 = vector.load %arg1[%c0_25, %c1536] : memref<16x2048xbf16, #tpu.memory_space<vmem>>, vector<16x512xbf16>
    %c3 = arith.constant 3 : index
    %c0_26 = arith.constant 0 : index
    %c0_27 = arith.constant 0 : index
    %28 = vector.load %arg2[%c3, %c0_26, %c0_27] : memref<4x512x128xbf16, #tpu.memory_space<vmem>>, vector<1x512x128xbf16>
    %29 = vector.shape_cast %28 : vector<1x512x128xbf16> to vector<512x128xbf16>
    %cst_28 = arith.constant dense<0.000000e+00> : vector<16x128xf32>
    %30 = tpu.matmul %27, %29, %cst_28 {dimension_numbers = #tpu.dot_dimension_numbers<[1], [0], [0], [1], [0, 0, 1, 1], [], []>} : vector<16x512xbf16>, vector<512x128xbf16>, vector<16x128xf32> -> vector<16x128xf32>
    %c3_29 = arith.constant 3 : index
    %c0_30 = arith.constant 0 : index
    %c0_31 = arith.constant 0 : index
    %31 = vector.load %arg3[%c3_29, %c0_30, %c0_31] : memref<4x1x128xf32, #tpu.memory_space<vmem>>, vector<1x1x128xf32>
    %32 = vector.shape_cast %31 : vector<1x1x128xf32> to vector<1x128xf32>
    %33 = vector.broadcast %32 : vector<1x128xf32> to vector<16x128xf32>
    %34 = arith.addf %30, %33 : vector<16x128xf32>
    %c0_32 = arith.constant 0 : index
    %c384 = arith.constant 384 : index
    %35 = vector.load %arg4[%c0_32, %c384] : memref<16x512xf32, #tpu.memory_space<vmem>>, vector<16x128xf32>
    tpu.vector_store %arg4[%c0_32, %c384], %34 {strides = array<i32>} : memref<16x512xf32, #tpu.memory_space<vmem>>, vector<16x128xf32>,
    return
  }
  func.func @transform_0(%arg0: i32) -> (i32, i32) {
    %c0_i32 = arith.constant 0 : i32
    %c0_i32_0 = arith.constant 0 : i32
    return %c0_i32, %arg0 : i32, i32
  }
  func.func @transform_1(%arg0: i32) -> (i32, i32, i32) {
    %c0_i32 = arith.constant 0 : i32
    %c0_i32_0 = arith.constant 0 : i32
    %c0_i32_1 = arith.constant 0 : i32
    return %arg0, %c0_i32, %c0_i32_0 : i32, i32, i32
  }
  func.func @transform_2(%arg0: i32) -> (i32, i32, i32) {
    %c0_i32 = arith.constant 0 : i32
    %c0_i32_0 = arith.constant 0 : i32
    %c0_i32_1 = arith.constant 0 : i32
    return %arg0, %c0_i32, %c0_i32_0 : i32, i32, i32
  }
  func.func @transform_3(%arg0: i32) -> (i32, i32) {
    %c0_i32 = arith.constant 0 : i32
    %c0_i32_0 = arith.constant 0 : i32
    return %c0_i32, %arg0 : i32, i32
  }
}

</mosaic_0001>

<llo_original>
// kernel: plate_classifier_forward.1
$region0: #{plate_classifier_forward.1}
  #allocation0 [shape = 'u32[]', space=smem, size = 0x4, offset = 0x4, fixed_abs, tag = 'smem constant byte address 0x4 - core index']
  #allocation1 [shape = 'u32[144,128]{1,0:T(1,128)}', space=vmem, size = 0x12000, scoped, tag = 'internal scratch']
  %s0 = inlined_call_operand.vmem [shape: bf16[16,4096], index: 0, kind: input, shape index: {}]
  %s1 = inlined_call_operand.vmem [shape: bf16[8,512,128], index: 1, kind: input, shape index: {}]
  %s2 = inlined_call_operand.vmem [shape: f32[8,1,128], index: 2, kind: input, shape index: {}]
  %s3 = inlined_call_operand.vmem [shape: f32[16,1024], index: 3, kind: output, shape index: {}]
  %s4 = sld [smem:[#allocation0]]
  $region87: #{plate_classifier_forward.1} parent=0
    _
  %s6 = ssub.s32 1, %s4
  %s7 = scalar_select 0, %s6, %s4
  $region1: #{plate_classifier_forward.1} parent=0
    #allocation2 [shape = 'u8[131072]{0}', space=vmem, size = 0x20000, scoped, tag = 'input window, operand 0']
    #allocation3 [shape = 'u8[65536]{0}', space=vmem, size = 0x10000, scoped, tag = 'output window, operand 0']
    loop: start=0, step=1, limit=4
    $region2: #{plate_classifier_forward.1} parent=1 // loop_pre_header
      _
    $region3: #{plate_classifier_forward.1} parent=1 // loop_header
      %s9 = sphi 0, %s13
      %p10 = scmp.ge.s32.totalorder %s9, 4
      %s19 = sphi 0, %s21
      %s22 = sphi 0, %s19
      %s23 = sphi 0, %s22
      %s39 = sphi 0, %s23
      %s45 = sphi 0, %s47
      %s48 = sphi 0, %s45
      %s49 = sphi 0, %s48
      %s65 = sphi 0, %s49
      %s71 = sphi 0, %s73
      %s74 = sphi 0, %s71
      %s75 = sphi 0, %s74
      %s91 = sphi 0, %s75
      %s97 = sphi 0, %s99
      %s100 = sphi 0, %s97
      %s101 = sphi 0, %s100
      %s117 = sphi 0, %s101
    $region4: #{plate_classifier_forward.1} parent=1 // loop_header_branch
      %12 = sbr.rel (%p10) target = $region8
    $region5: #{plate_classifier_forward.1} parent=1 // loop_body
      %s14 = ssub.s32 %s9, 1
      %s15 = ssub.s32 %s9, 2
      %s16 = sadd.s32 %s9, 1
      %s17 = ssub.s32 %s9, %s16
      %p18 = scmp.eq.s32.totalorder %s17, 0
      %s20 = sadd.s32 %s19, 1
      %s21 = scalar_select %p18, %s19, %s20
      %p24 = pneg %p18
      %p25 = scmp.eq.s32.totalorder %s9, 1
      %p26 = por %p24, %p25
      %p27 = scmp.ne.s32.totalorder %s19, %s22
      %p28 = scmp.eq.s32.totalorder %s9, 0
      %p29 = por %p27, %p28
      %p30 = scmp.ne.s32.totalorder %s19, %s22
      %p31 = scmp.eq.s32.totalorder %s14, 1
      %p32 = por %p30, %p31
      %p33 = scmp.ne.s32.totalorder %s22, %s23
      %p34 = scmp.eq.s32.totalorder %s14, 0
      %p35 = por %p33, %p34
      %p36 = scmp.ne.s32.totalorder %s22, %s23
      %p37 = scmp.eq.s32.totalorder %s15, 1
      %p38 = por %p36, %p37
      %p40 = scmp.ne.s32.totalorder %s23, %s39
      %p41 = scmp.eq.s32.totalorder %s15, 0
      %p42 = por %p40, %p41
      %s43 = ssub.s32 %s9, %s16
      %p44 = scmp.eq.s32.totalorder %s43, 0
      %s46 = sadd.s32 %s45, 1
      %s47 = scalar_select %p44, %s45, %s46
      %p50 = pneg %p44
      %p51 = scmp.eq.s32.totalorder %s9, 1
      %p52 = por %p50, %p51
      %p53 = scmp.ne.s32.totalorder %s45, %s48
      %p54 = scmp.eq.s32.totalorder %s9, 0
      %p55 = por %p53, %p54
      %p56 = scmp.ne.s32.totalorder %s45, %s48
      %p57 = scmp.eq.s32.totalorder %s14, 1
      %p58 = por %p56, %p57
      %p59 = scmp.ne.s32.totalorder %s48, %s49
      %p60 = scmp.eq.s32.totalorder %s14, 0
      %p61 = por %p59, %p60
      %p62 = scmp.ne.s32.totalorder %s48, %s49
      %p63 = scmp.eq.s32.totalorder %s15, 1
      %p64 = por %p62, %p63
      %p66 = scmp.ne.s32.totalorder %s49, %s65
      %p67 = scmp.eq.s32.totalorder %s15, 0
      %p68 = por %p66, %p67
      %s69 = ssub.s32 %s9, %s16
      %p70 = scmp.eq.s32.totalorder %s69, 0
      %s72 = sadd.s32 %s71, 1
      %s73 = scalar_select %p70, %s71, %s72
      %p76 = pneg %p70
      %p77 = scmp.eq.s32.totalorder %s9, 1
      %p78 = por %p76, %p77
      %p79 = scmp.ne.s32.totalorder %s71, %s74
      %p80 = scmp.eq.s32.totalorder %s9, 0
      %p81 = por %p79, %p80
      %p82 = scmp.ne.s32.totalorder %s71, %s74
      %p83 = scmp.eq.s32.totalorder %s14, 1
      %p84 = por %p82, %p83
      %p85 = scmp.ne.s32.totalorder %s74, %s75
      %p86 = scmp.eq.s32.totalorder %s14, 0
      %p87 = por %p85, %p86
      %p88 = scmp.ne.s32.totalorder %s74, %s75
      %p89 = scmp.eq.s32.totalorder %s15, 1
      %p90 = por %p88, %p89
      %p92 = scmp.ne.s32.totalorder %s75, %s91
      %p93 = scmp.eq.s32.totalorder %s15, 0
      %p94 = por %p92, %p93
      %s95 = ssub.s32 %s9, %s16
      %p96 = scmp.eq.s32.totalorder %s95, 0
      %s98 = sadd.s32 %s97, 1
      %s99 = scalar_select %p96, %s97, %s98
      %p102 = pneg %p96
      %p103 = scmp.eq.s32.totalorder %s9, 1
      %p104 = por %p102, %p103
      %p105 = scmp.ne.s32.totalorder %s97, %s100
      %p106 = scmp.eq.s32.totalorder %s9, 0
      %p107 = por %p105, %p106
      %p108 = scmp.ne.s32.totalorder %s97, %s100
      %p109 = scmp.eq.s32.totalorder %s14, 1
      %p110 = por %p108, %p109
      %p111 = scmp.ne.s32.totalorder %s100, %s101
      %p112 = scmp.eq.s32.totalorder %s14, 0
      %p113 = por %p111, %p112
      %p114 = scmp.ne.s32.totalorder %s100, %s101
      %p115 = scmp.eq.s32.totalorder %s15, 1
      %p116 = por %p114, %p115
      %p118 = scmp.ne.s32.totalorder %s101, %s117
      %p119 = scmp.eq.s32.totalorder %s15, 0
      %p120 = por %p118, %p119
      %p121 = scmp.le.s32.totalorder 1, %s9
      %p122 = scmp.lt.s32.totalorder %s9, 3
      %p123 = pnand %p121, %p122
      %p124 = pneg %p123
      // Predicated region
      $region9: #{plate_classifier_forward.1} parent=5 // pred_check
        _
      $region10: #{plate_classifier_forward.1} parent=5 // pred_check_branch
        %126 = sbr.rel (%p123) target = $region12
      $region11: #{plate_classifier_forward.1} parent=5 // pred_region
        %s127 = ssub.s32 %s9, 1
      $region12: #{plate_classifier_forward.1} parent=5 // pred_fallthru
        _
      %p128 = scmp.lt.s32.totalorder %s9, 2
      // Predicated region
      $region13: #{plate_classifier_forward.1} parent=5 // pred_check
        %p129 = pneg %p128
      $region14: #{plate_classifier_forward.1} parent=5 // pred_check_branch
        %131 = sbr.rel (%p129) target = $region16
      $region15: #{plate_classifier_forward.1} parent=5 // pred_region
        // Predicated region
        $region17: #{plate_classifier_forward.1} parent=15 // pred_check
          %p132 = pneg %p29
        $region18: #{plate_classifier_forward.1} parent=15 // pred_check_branch
          %134 = sbr.rel (%p132) target = $region20
        $region19: #{plate_classifier_forward.1} parent=15 // pred_region
          %s135 = sand.u32 %s19, 1
          %s136 = sand.u32 %s19, 1
          %s137 = smul.addr %s136, 128
          %s138 = scalar_lea.vmem [#allocation2], %s137
          %s139 = smul.u32 16, %s9
          %s140 = smul.addr %s139, 4
          %s141 = scalar_lea.vmem %s0, %s140
          // Predicated region
          $region21: #{plate_classifier_forward.1} parent=19 // pred_check
            _
          $region22: #{plate_classifier_forward.1} parent=19 // pred_check_branch
            %143 = sbr.rel (0) target = $region24
          $region23: #{plate_classifier_forward.1} parent=19 // pred_region
            // Predicated region
            $region25: #{plate_classifier_forward.1} parent=23 // pred_check
              _
            $region26: #{plate_classifier_forward.1} parent=23 // pred_check_branch
              %145 = sbr.rel (0) target = $region28
            $region27: #{plate_classifier_forward.1} parent=23 // pred_region
              loop: start=0, step=1, limit=1
              $region29: #{plate_classifier_forward.1} parent=27 // loop_pre_header
                _
              $region30: #{plate_classifier_forward.1} parent=27 // loop_header
                %s147 = sphi 0, %s151
                %p148 = scmp.ge.s32.totalorder %s147, 1
                %s152 = sphi %s141, %s141
                %s153 = sphi %s138, %s138
              $region31: #{plate_classifier_forward.1} parent=27 // loop_header_branch
                %150 = sbr.rel (%p148) target = $region35
              $region32: #{plate_classifier_forward.1} parent=27 // loop_body
                %v154 = vld [vmem:[%s152] sm:$0xff]
                %155 = vst [vmem:[%s153] sm:$0xff] %v154
                %v156 = vld [vmem:[%s152 + $0x8] sm:$0xff]
                %157 = vst [vmem:[%s153 + $0x8] sm:$0xff] %v156
                %v158 = vld [vmem:[%s152 + $0x10] sm:$0xff]
                %159 = vst [vmem:[%s153 + $0x10] sm:$0xff] %v158
                %v160 = vld [vmem:[%s152 + $0x18] sm:$0xff]
                %161 = vst [vmem:[%s153 + $0x18] sm:$0xff] %v160
                %v162 = vld [vmem:[%s152 + $0x20] sm:$0xff]
                %163 = vst [vmem:[%s153 + $0x20] sm:$0xff] %v162
                %v164 = vld [vmem:[%s152 + $0x28] sm:$0xff]
                %165 = vst [vmem:[%s153 + $0x28] sm:$0xff] %v164
                %v166 = vld [vmem:[%s152 + $0x30] sm:$0xff]
                %167 = vst [vmem:[%s153 + $0x30] sm:$0xff] %v166
                %v168 = vld [vmem:[%s152 + $0x38] sm:$0xff]
                %169 = vst [vmem:[%s153 + $0x38] sm:$0xff] %v168
                %v170 = vld [vmem:[%s152 + $0x80] sm:$0xff]
                %171 = vst [vmem:[%s153 + $0x40] sm:$0xff] %v170
                %v172 = vld [vmem:[%s152 + $0x88] sm:$0xff]
                %173 = vst [vmem:[%s153 + $0x48] sm:$0xff] %v172
                %v174 = vld [vmem:[%s152 + $0x90] sm:$0xff]
                %175 = vst [vmem:[%s153 + $0x50] sm:$0xff] %v174
                %v176 = vld [vmem:[%s152 + $0x98] sm:$0xff]
                %177 = vst [vmem:[%s153 + $0x58] sm:$0xff] %v176
                %v178 = vld [vmem:[%s152 + $0xa0] sm:$0xff]
                %179 = vst [vmem:[%s153 + $0x60] sm:$0xff] %v178
                %v180 = vld [vmem:[%s152 + $0xa8] sm:$0xff]
                %181 = vst [vmem:[%s153 + $0x68] sm:$0xff] %v180
                %v182 = vld [vmem:[%s152 + $0xb0] sm:$0xff]
                %183 = vst [vmem:[%s153 + $0x70] sm:$0xff] %v182
                %v184 = vld [vmem:[%s152 + $0xb8] sm:$0xff]
                %185 = vst [vmem:[%s153 + $0x78] sm:$0xff] %v184
              $region33: #{plate_classifier_forward.1} parent=27 // loop_footer
                %s151 = sadd.s32 1, %s147
              $region34: #{plate_classifier_forward.1} parent=27 // loop_footer_branch
                %146 = sbr.rel target = $region30
              $region35: #{plate_classifier_forward.1} parent=27 // loop_exit
                _
            $region28: #{plate_classifier_forward.1} parent=23 // pred_fallthru
              _
            // Predicated region
            $region36: #{plate_classifier_forward.1} parent=23 // pred_check
              _
            $region37: #{plate_classifier_forward.1} parent=23 // pred_check_branch
              %187 = sbr.rel target = $region39
            $region38: #{plate_classifier_forward.1} parent=23 // pred_region
              _
            $region39: #{plate_classifier_forward.1} parent=23 // pred_fallthru
              _
          $region24: #{plate_classifier_forward.1} parent=19 // pred_fallthru
            _
          %188 = vnop
        $region20: #{plate_classifier_forward.1} parent=15 // pred_fallthru
          _
        // Predicated region
        $region40: #{plate_classifier_forward.1} parent=15 // pred_check
          %p189 = pneg %p55
        $region41: #{plate_classifier_forward.1} parent=15 // pred_check_branch
          %191 = sbr.rel (%p189) target = $region43
        $region42: #{plate_classifier_forward.1} parent=15 // pred_region
          %s192 = smul.u32 4, %s9
          %p193 = scmp.lt.s32.totalorder %s192, 7
          %s194 = scalar_select %p193, %s192, 7
          %s195 = smul.addr %s194, 64
          %s196 = smul.addr %s195, 4
          %s197 = scalar_lea.vmem %s1, %s196
          %s198 = smul.u32 4, %s9
        $region43: #{plate_classifier_forward.1} parent=15 // pred_fallthru
          _
        // Predicated region
        $region44: #{plate_classifier_forward.1} parent=15 // pred_check
          %p199 = pneg %p81
        $region45: #{plate_classifier_forward.1} parent=15 // pred_check_branch
          %201 = sbr.rel (%p199) target = $region47
        $region46: #{plate_classifier_forward.1} parent=15 // pred_region
          %s202 = smul.u32 4, %s9
          %p203 = scmp.lt.s32.totalorder %s202, 7
          %s204 = scalar_select %p203, %s202, 7
          %s205 = scalar_lea.vmem %s2, %s204
          %s206 = smul.u32 4, %s9
        $region47: #{plate_classifier_forward.1} parent=15 // pred_fallthru
          _
      $region16: #{plate_classifier_forward.1} parent=5 // pred_fallthru
        _
      %p207 = scmp.le.s32.totalorder 1, %s9
      %p208 = scmp.lt.s32.totalorder %s9, 3
      %p209 = pnand %p207, %p208
      %p210 = pneg %p209
      // Predicated region
      $region48: #{plate_classifier_forward.1} parent=5 // pred_check
        _
      $region49: #{plate_classifier_forward.1} parent=5 // pred_check_branch
        %212 = sbr.rel (%p209) target = $region51
      $region50: #{plate_classifier_forward.1} parent=5 // pred_region
        %s213 = ssub.s32 %s9, 1
        %s214 = sand.u32 %s22, 1
        %s215 = sand.u32 %s22, 1
        %s216 = smul.addr %s215, 128
        %s217 = scalar_lea.vmem [#allocation2], %s216
        // Predicated region
        $region52: #{plate_classifier_forward.1} parent=50 // pred_check
          %p218 = pneg %p35
        $region53: #{plate_classifier_forward.1} parent=50 // pred_check_branch
          %220 = sbr.rel (%p218) target = $region55
        $region54: #{plate_classifier_forward.1} parent=50 // pred_region
          _
        $region55: #{plate_classifier_forward.1} parent=50 // pred_fallthru
          _
        %s221 = sand.u32 %s22, 1
        %s222 = sand.u32 %s22, 1
        %s223 = smul.addr %s222, 128
        %s224 = scalar_lea.vmem [#allocation2], %s223
        %p225 = pneg %p35
        %p226 = pneg %p32
        %s227 = smul.u32 4, %s14
        %p228 = scmp.lt.s32.totalorder %s227, 7
        %s229 = scalar_select %p228, %s227, 7
        %s230 = smul.addr %s229, 64
        %s231 = smul.addr %s230, 4
        %s232 = scalar_lea.vmem %s1, %s231
        %p233 = pneg %p61
        %p234 = pneg %p58
        %s235 = smul.u32 4, %s14
        %p236 = scmp.lt.s32.totalorder %s235, 7
        %s237 = scalar_select %p236, %s235, 7
        %s238 = scalar_lea.vmem %s2, %s237
        %p239 = pneg %p87
        %p240 = pneg %p84
        %p241 = pneg %p113
        %p242 = pneg %p110
        %s243 = sand.u32 %s100, 1
        %s244 = sand.u32 %s100, 1
        %s245 = smul.addr %s244, 64
        %s246 = scalar_lea.vmem [#allocation3], %s245
        %s247 = smul.u32 16, %s14
        %s248 = smul.u32 4, %s14
        %p249 = scmp.lt.s32.totalorder %s248, 7
        %s250 = scalar_select %p249, %s248, 7
        %s251 = smul.addr %s250, 64
        %s252 = smul.addr %s251, 4
        %s253 = scalar_lea.vmem %s1, %s252
        %s254 = smul.u32 4, %s14
        %s255 = smul.u32 4, %s14
        %p256 = scmp.lt.s32.totalorder %s255, 7
        %s257 = scalar_select %p256, %s255, 7
        %s258 = scalar_lea.vmem %s2, %s257
        %s259 = smul.u32 4, %s14
        %s260 = smul.u32 4, %s14
        %v262 = vld [vmem:[%s217] sm:$0xff]
        %v263 = vld [vmem:[%s217 + $0x8] sm:$0xff]
        %v264 = vld [vmem:[%s217 + $0x40] sm:$0xff]
        %v265 = vld [vmem:[%s217 + $0x48] sm:$0xff]
        %v266 = vld [vmem:[%s253] sm:$0xf]
        %v267 = vld [vmem:[%s253 + $0x4] sm:$0xf]
        %v268 = vld [vmem:[%s253 + $0x8] sm:$0xf]
        %v269 = vld [vmem:[%s253 + $0xc] sm:$0xf]
        %v270 = vld [vmem:[%s253 + $0x10] sm:$0xf]
        %v271 = vld [vmem:[%s253 + $0x14] sm:$0xf]
        %v272 = vld [vmem:[%s253 + $0x18] sm:$0xf]
        %v273 = vld [vmem:[%s253 + $0x1c] sm:$0xf]
        %v274 = vld [vmem:[%s253 + $0x20] sm:$0xf]
        %v275 = vld [vmem:[%s253 + $0x24] sm:$0xf]
        %v276 = vld [vmem:[%s253 + $0x28] sm:$0xf]
        %v277 = vld [vmem:[%s253 + $0x2c] sm:$0xf]
        %v278 = vld [vmem:[%s253 + $0x30] sm:$0xf]
        %v279 = vld [vmem:[%s253 + $0x34] sm:$0xf]
        %v280 = vld [vmem:[%s253 + $0x38] sm:$0xf]
        %v281 = vld [vmem:[%s253 + $0x3c] sm:$0xf]
        %v282 = vld [vmem:[%s253 + $0x40] sm:$0xf]
        %v283 = vld [vmem:[%s253 + $0x44] sm:$0xf]
        %v284 = vld [vmem:[%s253 + $0x48] sm:$0xf]
        %v285 = vld [vmem:[%s253 + $0x4c] sm:$0xf]
        %v286 = vld [vmem:[%s253 + $0x50] sm:$0xf]
        %v287 = vld [vmem:[%s253 + $0x54] sm:$0xf]
        %v288 = vld [vmem:[%s253 + $0x58] sm:$0xf]
        %v289 = vld [vmem:[%s253 + $0x5c] sm:$0xf]
        %v290 = vld [vmem:[%s253 + $0x60] sm:$0xf]
        %v291 = vld [vmem:[%s253 + $0x64] sm:$0xf]
        %v292 = vld [vmem:[%s253 + $0x68] sm:$0xf]
        %v293 = vld [vmem:[%s253 + $0x6c] sm:$0xf]
        %v294 = vld [vmem:[%s253 + $0x70] sm:$0xf]
        %v295 = vld [vmem:[%s253 + $0x74] sm:$0xf]
        %v296 = vld [vmem:[%s253 + $0x78] sm:$0xf]
        %v297 = vld [vmem:[%s253 + $0x7c] sm:$0xf]
        %v298 = vld [vmem:[%s253 + $0x80] sm:$0xf]
        %v299 = vld [vmem:[%s253 + $0x84] sm:$0xf]
        %v300 = vld [vmem:[%s253 + $0x88] sm:$0xf]
        %v301 = vld [vmem:[%s253 + $0x8c] sm:$0xf]
        %v302 = vld [vmem:[%s253 + $0x90] sm:$0xf]
        %v303 = vld [vmem:[%s253 + $0x94] sm:$0xf]
        %v304 = vld [vmem:[%s253 + $0x98] sm:$0xf]
        %v305 = vld [vmem:[%s253 + $0x9c] sm:$0xf]
        %v306 = vld [vmem:[%s253 + $0xa0] sm:$0xf]
        %v307 = vld [vmem:[%s253 + $0xa4] sm:$0xf]
        %v308 = vld [vmem:[%s253 + $0xa8] sm:$0xf]
        %v309 = vld [vmem:[%s253 + $0xac] sm:$0xf]
        %v310 = vld [vmem:[%s253 + $0xb0] sm:$0xf]
        %v311 = vld [vmem:[%s253 + $0xb4] sm:$0xf]
        %v312 = vld [vmem:[%s253 + $0xb8] sm:$0xf]
        %v313 = vld [vmem:[%s253 + $0xbc] sm:$0xf]
        %v314 = vld [vmem:[%s253 + $0xc0] sm:$0xf]
        %v315 = vld [vmem:[%s253 + $0xc4] sm:$0xf]
        %v316 = vld [vmem:[%s253 + $0xc8] sm:$0xf]
        %v317 = vld [vmem:[%s253 + $0xcc] sm:$0xf]
        %v318 = vld [vmem:[%s253 + $0xd0] sm:$0xf]
        %v319 = vld [vmem:[%s253 + $0xd4] sm:$0xf]
        %v320 = vld [vmem:[%s253 + $0xd8] sm:$0xf]
        %v321 = vld [vmem:[%s253 + $0xdc] sm:$0xf]
        %v322 = vld [vmem:[%s253 + $0xe0] sm:$0xf]
        %v323 = vld [vmem:[%s253 + $0xe4] sm:$0xf]
        %v324 = vld [vmem:[%s253 + $0xe8] sm:$0xf]
        %v325 = vld [vmem:[%s253 + $0xec] sm:$0xf]
        %v326 = vld [vmem:[%s253 + $0xf0] sm:$0xf]
        %v327 = vld [vmem:[%s253 + $0xf4] sm:$0xf]
        %v328 = vld [vmem:[%s253 + $0xf8] sm:$0xf]
        %v329 = vld [vmem:[%s253 + $0xfc] sm:$0xf]
        %v330 = vld [vmem:[%s258] sm:$0x1]
        %v332 = vlaneseq
        %v333 = vshrl.u32 %v332, 7
        %v334 = vsub.s32 0, %v333
        %v335 = vrot.slane %v330, %v334
        %v341 = vunpack.c.l.b16 %v262
        %v342 = vunpack.c.h.b16 %v262
        %v343 = vunpack.c.l.b16 %v263
        %v344 = vunpack.c.h.b16 %v263
        %v345 = vunpack.c.l.b16 %v264
        %v346 = vunpack.c.h.b16 %v264
        %v347 = vunpack.c.l.b16 %v265
        %v348 = vunpack.c.h.b16 %v265
        %v349 = vpack.c.b16 %v345, %v341
        %v350 = vpack.c.b16 %v346, %v342
        %v351 = vpack.c.b16 %v347, %v343
        %v352 = vpack.c.b16 %v348, %v344
        %v421 = vunpack.c.l.b16 %v266
        %v422 = vunpack.c.l.b16 %v267
        %v423 = vunpack.c.l.b16 %v268
        %v424 = vunpack.c.l.b16 %v269
        %v425 = vunpack.c.l.b16 %v270
        %v426 = vunpack.c.l.b16 %v271
        %v427 = vunpack.c.l.b16 %v272
        %v428 = vunpack.c.l.b16 %v273
        %v429 = vunpack.c.l.b16 %v274
        %v430 = vunpack.c.l.b16 %v275
        %v431 = vunpack.c.l.b16 %v276
        %v432 = vunpack.c.l.b16 %v277
        %v433 = vunpack.c.l.b16 %v278
        %v434 = vunpack.c.l.b16 %v279
        %v435 = vunpack.c.l.b16 %v280
        %v436 = vunpack.c.l.b16 %v281
        %v437 = vunpack.c.l.b16 %v282
        %v438 = vunpack.c.l.b16 %v283
        %v439 = vunpack.c.l.b16 %v284
        %v440 = vunpack.c.l.b16 %v285
        %v441 = vunpack.c.l.b16 %v286
        %v442 = vunpack.c.l.b16 %v287
        %v443 = vunpack.c.l.b16 %v288
        %v444 = vunpack.c.l.b16 %v289
        %v445 = vunpack.c.l.b16 %v290
        %v446 = vunpack.c.l.b16 %v291
        %v447 = vunpack.c.l.b16 %v292
        %v448 = vunpack.c.l.b16 %v293
        %v449 = vunpack.c.l.b16 %v294
        %v450 = vunpack.c.l.b16 %v295
        %v451 = vunpack.c.l.b16 %v296
        %v452 = vunpack.c.l.b16 %v297
        %v453 = vunpack.c.l.b16 %v298
        %v454 = vunpack.c.l.b16 %v299
        %v455 = vunpack.c.l.b16 %v300
        %v456 = vunpack.c.l.b16 %v301
        %v457 = vunpack.c.l.b16 %v302
        %v458 = vunpack.c.l.b16 %v303
        %v459 = vunpack.c.l.b16 %v304
        %v460 = vunpack.c.l.b16 %v305
        %v461 = vunpack.c.l.b16 %v306
        %v462 = vunpack.c.l.b16 %v307
        %v463 = vunpack.c.l.b16 %v308
        %v464 = vunpack.c.l.b16 %v309
        %v465 = vunpack.c.l.b16 %v310
        %v466 = vunpack.c.l.b16 %v311
        %v467 = vunpack.c.l.b16 %v312
        %v468 = vunpack.c.l.b16 %v313
        %v469 = vunpack.c.l.b16 %v314
        %v470 = vunpack.c.l.b16 %v315
        %v471 = vunpack.c.l.b16 %v316
        %v472 = vunpack.c.l.b16 %v317
        %v473 = vunpack.c.l.b16 %v318
        %v474 = vunpack.c.l.b16 %v319
        %v475 = vunpack.c.l.b16 %v320
        %v476 = vunpack.c.l.b16 %v321
        %v477 = vunpack.c.l.b16 %v322
        %v478 = vunpack.c.l.b16 %v323
        %v479 = vunpack.c.l.b16 %v324
        %v480 = vunpack.c.l.b16 %v325
        %v481 = vunpack.c.l.b16 %v326
        %v482 = vunpack.c.l.b16 %v327
        %v483 = vunpack.c.l.b16 %v328
        %v484 = vunpack.c.l.b16 %v329
        %v485 = vpack.c.b16 %v422, %v421
        %v486 = vpack.c.b16 %v424, %v423
        %v487 = vpack.c.b16 %v426, %v425
        %v488 = vpack.c.b16 %v428, %v427
        %v489 = vpack.c.b16 %v430, %v429
        %v490 = vpack.c.b16 %v432, %v431
        %v491 = vpack.c.b16 %v434, %v433
        %v492 = vpack.c.b16 %v436, %v435
        %v493 = vpack.c.b16 %v438, %v437
        %v494 = vpack.c.b16 %v440, %v439
        %v495 = vpack.c.b16 %v442, %v441
        %v496 = vpack.c.b16 %v444, %v443
        %v497 = vpack.c.b16 %v446, %v445
        %v498 = vpack.c.b16 %v448, %v447
        %v499 = vpack.c.b16 %v450, %v449
        %v500 = vpack.c.b16 %v452, %v451
        %v501 = vpack.c.b16 %v454, %v453
        %v502 = vpack.c.b16 %v456, %v455
        %v503 = vpack.c.b16 %v458, %v457
        %v504 = vpack.c.b16 %v460, %v459
        %v505 = vpack.c.b16 %v462, %v461
        %v506 = vpack.c.b16 %v464, %v463
        %v507 = vpack.c.b16 %v466, %v465
        %v508 = vpack.c.b16 %v468, %v467
        %v509 = vpack.c.b16 %v470, %v469
        %v510 = vpack.c.b16 %v472, %v471
        %v511 = vpack.c.b16 %v474, %v473
        %v512 = vpack.c.b16 %v476, %v475
        %v513 = vpack.c.b16 %v478, %v477
        %v514 = vpack.c.b16 %v480, %v479
        %v515 = vpack.c.b16 %v482, %v481
        %v516 = vpack.c.b16 %v484, %v483
        %549 = vmatprep.subr.bf16.mxu0 0
        %550 = vmatpush1.bf16.msra.mxu0 %v485
        %551 = vmatprep.subr.bf16.mxu0 0
        %552 = vmatpush1.bf16.msra.mxu0 %v486
        %553 = vmatprep.subr.bf16.mxu0 0
        %554 = vmatpush1.bf16.msra.mxu0 %v487
        %555 = vmatprep.subr.bf16.mxu0 0
        %556 = vmatpush1.bf16.msra.mxu0 %v488
        %557 = vmatprep.subr.bf16.mxu0 0
        %558 = vmatpush1.bf16.msra.mxu0 %v489
        %559 = vmatprep.subr.bf16.mxu0 0
        %560 = vmatpush1.bf16.msra.mxu0 %v490
        %561 = vmatprep.subr.bf16.mxu0 0
        %562 = vmatpush1.bf16.msra.mxu0 %v491
        %563 = vmatprep.subr.bf16.mxu0 0
        %564 = vmatpush1.bf16.msra.mxu0 %v492
        %565 = vmatprep.subr.bf16.mxu0 0
        %566 = vmatpush1.bf16.msra.mxu0 %v493
        %567 = vmatprep.subr.bf16.mxu0 0
        %568 = vmatpush1.bf16.msra.mxu0 %v494
        %569 = vmatprep.subr.bf16.mxu0 0
        %570 = vmatpush1.bf16.msra.mxu0 %v495
        %571 = vmatprep.subr.bf16.mxu0 0
        %572 = vmatpush1.bf16.msra.mxu0 %v496
        %573 = vmatprep.subr.bf16.mxu0 0
        %574 = vmatpush1.bf16.msra.mxu0 %v497
        %575 = vmatprep.subr.bf16.mxu0 0
        %576 = vmatpush1.bf16.msra.mxu0 %v498
        %577 = vmatprep.subr.bf16.mxu0 0
        %578 = vmatpush1.bf16.msra.mxu0 %v499
        %579 = vmatprep.subr.bf16.mxu0 0
        %580 = vmatpush1.bf16.msra.mxu0 %v500
        %581 = vmatprep.mubr.bf16.mxu0 %v350
        %582 = vmatmul.mubr.bf16.gmra.mrb[0].mxu0 %v349
        %v583 = vpop.f32.mrb[0].mxu0
        %v584 = vadd.f32 %v335, %v583
        %v585 = vpop.f32.mrb[0].mxu0
        %v586 = vpop.f32.mrb[0].mxu0
        %v587 = vadd.f32 %v335, %v586
        %v588 = vpop.f32.mrb[0].mxu0
        %589 = vdwg.mxu0
        %590 = vmatprep.subr.bf16.mxu0 0
        %591 = vmatpush1.bf16.msra.mxu0 %v501
        %592 = vmatprep.subr.bf16.mxu0 0
        %593 = vmatpush1.bf16.msra.mxu0 %v502
        %594 = vmatprep.subr.bf16.mxu0 0
        %595 = vmatpush1.bf16.msra.mxu0 %v503
        %596 = vmatprep.subr.bf16.mxu0 0
        %597 = vmatpush1.bf16.msra.mxu0 %v504
        %598 = vmatprep.subr.bf16.mxu0 0
        %599 = vmatpush1.bf16.msra.mxu0 %v505
        %600 = vmatprep.subr.bf16.mxu0 0
        %601 = vmatpush1.bf16.msra.mxu0 %v506
        %602 = vmatprep.subr.bf16.mxu0 0
        %603 = vmatpush1.bf16.msra.mxu0 %v507
        %604 = vmatprep.subr.bf16.mxu0 0
        %605 = vmatpush1.bf16.msra.mxu0 %v508
        %606 = vmatprep.subr.bf16.mxu0 0
        %607 = vmatpush1.bf16.msra.mxu0 %v509
        %608 = vmatprep.subr.bf16.mxu0 0
        %609 = vmatpush1.bf16.msra.mxu0 %v510
        %610 = vmatprep.subr.bf16.mxu0 0
        %611 = vmatpush1.bf16.msra.mxu0 %v511
        %612 = vmatprep.subr.bf16.mxu0 0
        %613 = vmatpush1.bf16.msra.mxu0 %v512
        %614 = vmatprep.subr.bf16.mxu0 0
        %615 = vmatpush1.bf16.msra.mxu0 %v513
        %616 = vmatprep.subr.bf16.mxu0 0
        %617 = vmatpush1.bf16.msra.mxu0 %v514
        %618 = vmatprep.subr.bf16.mxu0 0
        %619 = vmatpush1.bf16.msra.mxu0 %v515
        %620 = vmatprep.subr.bf16.mxu0 0
        %621 = vmatpush1.bf16.msra.mxu0 %v516
        %622 = vmatprep.mubr.bf16.mxu0 %v352
        %623 = vmatmul.mubr.bf16.gmra.mrb[0].mxu0 %v351
        %v624 = vpop.f32.mrb[0].mxu0
        %v625 = vadd.f32 %v584, %v624
        %v626 = vpop.f32.mrb[0].mxu0
        %v627 = vpop.f32.mrb[0].mxu0
        %v628 = vadd.f32 %v587, %v627
        %v629 = vpop.f32.mrb[0].mxu0
        %630 = vdwg.mxu0
        %631 = vst [vmem:[%s246] sm:$0xff] %v625
        %632 = vst [vmem:[%s246 + $0x20] sm:$0xff] %v628
        %v633 = vld [vmem:[%s217 + $0x10] sm:$0xff]
        %v634 = vld [vmem:[%s217 + $0x18] sm:$0xff]
        %v635 = vld [vmem:[%s217 + $0x50] sm:$0xff]
        %v636 = vld [vmem:[%s217 + $0x58] sm:$0xff]
        %s637 = scalar_lea.vmem %s253, 256
        %v638 = vld [vmem:[%s637] sm:$0xf]
        %v639 = vld [vmem:[%s637 + $0x4] sm:$0xf]
        %v640 = vld [vmem:[%s637 + $0x8] sm:$0xf]
        %v641 = vld [vmem:[%s637 + $0xc] sm:$0xf]
        %v642 = vld [vmem:[%s637 + $0x10] sm:$0xf]
        %v643 = vld [vmem:[%s637 + $0x14] sm:$0xf]
        %v644 = vld [vmem:[%s637 + $0x18] sm:$0xf]
        %v645 = vld [vmem:[%s637 + $0x1c] sm:$0xf]
        %v646 = vld [vmem:[%s637 + $0x20] sm:$0xf]
        %v647 = vld [vmem:[%s637 + $0x24] sm:$0xf]
        %v648 = vld [vmem:[%s637 + $0x28] sm:$0xf]
        %v649 = vld [vmem:[%s637 + $0x2c] sm:$0xf]
        %v650 = vld [vmem:[%s637 + $0x30] sm:$0xf]
        %v651 = vld [vmem:[%s637 + $0x34] sm:$0xf]
        %v652 = vld [vmem:[%s637 + $0x38] sm:$0xf]
        %v653 = vld [vmem:[%s637 + $0x3c] sm:$0xf]
        %v654 = vld [vmem:[%s637 + $0x40] sm:$0xf]
        %v655 = vld [vmem:[%s637 + $0x44] sm:$0xf]
        %v656 = vld [vmem:[%s637 + $0x48] sm:$0xf]
        %v657 = vld [vmem:[%s637 + $0x4c] sm:$0xf]
        %v658 = vld [vmem:[%s637 + $0x50] sm:$0xf]
        %v659 = vld [vmem:[%s637 + $0x54] sm:$0xf]
        %v660 = vld [vmem:[%s637 + $0x58] sm:$0xf]
        %v661 = vld [vmem:[%s637 + $0x5c] sm:$0xf]
        %v662 = vld [vmem:[%s637 + $0x60] sm:$0xf]
        %v663 = vld [vmem:[%s637 + $0x64] sm:$0xf]
        %v664 = vld [vmem:[%s637 + $0x68] sm:$0xf]
        %v665 = vld [vmem:[%s637 + $0x6c] sm:$0xf]
        %v666 = vld [vmem:[%s637 + $0x70] sm:$0xf]
        %v667 = vld [vmem:[%s637 + $0x74] sm:$0xf]
        %v668 = vld [vmem:[%s637 + $0x78] sm:$0xf]
        %v669 = vld [vmem:[%s637 + $0x7c] sm:$0xf]
        %v670 = vld [vmem:[%s637 + $0x80] sm:$0xf]
        %v671 = vld [vmem:[%s637 + $0x84] sm:$0xf]
        %v672 = vld [vmem:[%s637 + $0x88] sm:$0xf]
        %v673 = vld [vmem:[%s637 + $0x8c] sm:$0xf]
        %v674 = vld [vmem:[%s637 + $0x90] sm:$0xf]
        %v675 = vld [vmem:[%s637 + $0x94] sm:$0xf]
        %v676 = vld [vmem:[%s637 + $0x98] sm:$0xf]
        %v677 = vld [vmem:[%s637 + $0x9c] sm:$0xf]
        %v678 = vld [vmem:[%s637 + $0xa0] sm:$0xf]
        %v679 = vld [vmem:[%s637 + $0xa4] sm:$0xf]
        %v680 = vld [vmem:[%s637 + $0xa8] sm:$0xf]
        %v681 = vld [vmem:[%s637 + $0xac] sm:$0xf]
        %v682 = vld [vmem:[%s637 + $0xb0] sm:$0xf]
        %v683 = vld [vmem:[%s637 + $0xb4] sm:$0xf]
        %v684 = vld [vmem:[%s637 + $0xb8] sm:$0xf]
        %v685 = vld [vmem:[%s637 + $0xbc] sm:$0xf]
        %v686 = vld [vmem:[%s637 + $0xc0] sm:$0xf]
        %v687 = vld [vmem:[%s637 + $0xc4] sm:$0xf]
        %v688 = vld [vmem:[%s637 + $0xc8] sm:$0xf]
        %v689 = vld [vmem:[%s637 + $0xcc] sm:$0xf]
        %v690 = vld [vmem:[%s637 + $0xd0] sm:$0xf]
        %v691 = vld [vmem:[%s637 + $0xd4] sm:$0xf]
        %v692 = vld [vmem:[%s637 + $0xd8] sm:$0xf]
        %v693 = vld [vmem:[%s637 + $0xdc] sm:$0xf]
        %v694 = vld [vmem:[%s637 + $0xe0] sm:$0xf]
        %v695 = vld [vmem:[%s637 + $0xe4] sm:$0xf]
        %v696 = vld [vmem:[%s637 + $0xe8] sm:$0xf]
        %v697 = vld [vmem:[%s637 + $0xec] sm:$0xf]
        %v698 = vld [vmem:[%s637 + $0xf0] sm:$0xf]
        %v699 = vld [vmem:[%s637 + $0xf4] sm:$0xf]
        %v700 = vld [vmem:[%s637 + $0xf8] sm:$0xf]
        %v701 = vld [vmem:[%s637 + $0xfc] sm:$0xf]
        %s702 = scalar_lea.vmem %s258, 1
        %v703 = vld [vmem:[%s702] sm:$0x1]
        %v705 = vlaneseq
        %v706 = vshrl.u32 %v705, 7
        %v707 = vsub.s32 0, %v706
        %v708 = vrot.slane %v703, %v707
        %v714 = vunpack.c.l.b16 %v633
        %v715 = vunpack.c.h.b16 %v633
        %v716 = vunpack.c.l.b16 %v634
        %v717 = vunpack.c.h.b16 %v634
        %v718 = vunpack.c.l.b16 %v635
        %v719 = vunpack.c.h.b16 %v635
        %v720 = vunpack.c.l.b16 %v636
        %v721 = vunpack.c.h.b16 %v636
        %v722 = vpack.c.b16 %v718, %v714
        %v723 = vpack.c.b16 %v719, %v715
        %v724 = vpack.c.b16 %v720, %v716
        %v725 = vpack.c.b16 %v721, %v717
        %v794 = vunpack.c.l.b16 %v638
        %v795 = vunpack.c.l.b16 %v639
        %v796 = vunpack.c.l.b16 %v640
        %v797 = vunpack.c.l.b16 %v641
        %v798 = vunpack.c.l.b16 %v642
        %v799 = vunpack.c.l.b16 %v643
        %v800 = vunpack.c.l.b16 %v644
        %v801 = vunpack.c.l.b16 %v645
        %v802 = vunpack.c.l.b16 %v646
        %v803 = vunpack.c.l.b16 %v647
        %v804 = vunpack.c.l.b16 %v648
        %v805 = vunpack.c.l.b16 %v649
        %v806 = vunpack.c.l.b16 %v650
        %v807 = vunpack.c.l.b16 %v651
        %v808 = vunpack.c.l.b16 %v652
        %v809 = vunpack.c.l.b16 %v653
        %v810 = vunpack.c.l.b16 %v654
        %v811 = vunpack.c.l.b16 %v655
        %v812 = vunpack.c.l.b16 %v656
        %v813 = vunpack.c.l.b16 %v657
        %v814 = vunpack.c.l.b16 %v658
        %v815 = vunpack.c.l.b16 %v659
        %v816 = vunpack.c.l.b16 %v660
        %v817 = vunpack.c.l.b16 %v661
        %v818 = vunpack.c.l.b16 %v662
        %v819 = vunpack.c.l.b16 %v663
        %v820 = vunpack.c.l.b16 %v664
        %v821 = vunpack.c.l.b16 %v665
        %v822 = vunpack.c.l.b16 %v666
        %v823 = vunpack.c.l.b16 %v667
        %v824 = vunpack.c.l.b16 %v668
        %v825 = vunpack.c.l.b16 %v669
        %v826 = vunpack.c.l.b16 %v670
        %v827 = vunpack.c.l.b16 %v671
        %v828 = vunpack.c.l.b16 %v672
        %v829 = vunpack.c.l.b16 %v673
        %v830 = vunpack.c.l.b16 %v674
        %v831 = vunpack.c.l.b16 %v675
        %v832 = vunpack.c.l.b16 %v676
        %v833 = vunpack.c.l.b16 %v677
        %v834 = vunpack.c.l.b16 %v678
        %v835 = vunpack.c.l.b16 %v679
        %v836 = vunpack.c.l.b16 %v680
        %v837 = vunpack.c.l.b16 %v681
        %v838 = vunpack.c.l.b16 %v682
        %v839 = vunpack.c.l.b16 %v683
        %v840 = vunpack.c.l.b16 %v684
        %v841 = vunpack.c.l.b16 %v685
        %v842 = vunpack.c.l.b16 %v686
        %v843 = vunpack.c.l.b16 %v687
        %v844 = vunpack.c.l.b16 %v688
        %v845 = vunpack.c.l.b16 %v689
        %v846 = vunpack.c.l.b16 %v690
        %v847 = vunpack.c.l.b16 %v691
        %v848 = vunpack.c.l.b16 %v692
        %v849 = vunpack.c.l.b16 %v693
        %v850 = vunpack.c.l.b16 %v694
        %v851 = vunpack.c.l.b16 %v695
        %v852 = vunpack.c.l.b16 %v696
        %v853 = vunpack.c.l.b16 %v697
        %v854 = vunpack.c.l.b16 %v698
        %v855 = vunpack.c.l.b16 %v699
        %v856 = vunpack.c.l.b16 %v700
        %v857 = vunpack.c.l.b16 %v701
        %v858 = vpack.c.b16 %v795, %v794
        %v859 = vpack.c.b16 %v797, %v796
        %v860 = vpack.c.b16 %v799, %v798
        %v861 = vpack.c.b16 %v801, %v800
        %v862 = vpack.c.b16 %v803, %v802
        %v863 = vpack.c.b16 %v805, %v804
        %v864 = vpack.c.b16 %v807, %v806
        %v865 = vpack.c.b16 %v809, %v808
        %v866 = vpack.c.b16 %v811, %v810
        %v867 = vpack.c.b16 %v813, %v812
        %v868 = vpack.c.b16 %v815, %v814
        %v869 = vpack.c.b16 %v817, %v816
        %v870 = vpack.c.b16 %v819, %v818
        %v871 = vpack.c.b16 %v821, %v820
        %v872 = vpack.c.b16 %v823, %v822
        %v873 = vpack.c.b16 %v825, %v824
        %v874 = vpack.c.b16 %v827, %v826
        %v875 = vpack.c.b16 %v829, %v828
        %v876 = vpack.c.b16 %v831, %v830
        %v877 = vpack.c.b16 %v833, %v832
        %v878 = vpack.c.b16 %v835, %v834
        %v879 = vpack.c.b16 %v837, %v836
        %v880 = vpack.c.b16 %v839, %v838
        %v881 = vpack.c.b16 %v841, %v840
        %v882 = vpack.c.b16 %v843, %v842
        %v883 = vpack.c.b16 %v845, %v844
        %v884 = vpack.c.b16 %v847, %v846
        %v885 = vpack.c.b16 %v849, %v848
        %v886 = vpack.c.b16 %v851, %v850
        %v887 = vpack.c.b16 %v853, %v852
        %v888 = vpack.c.b16 %v855, %v854
        %v889 = vpack.c.b16 %v857, %v856
        %922 = vmatprep.subr.bf16.mxu0 0
        %923 = vmatpush1.bf16.msra.mxu0 %v858
        %924 = vmatprep.subr.bf16.mxu0 0
        %925 = vmatpush1.bf16.msra.mxu0 %v859
        %926 = vmatprep.subr.bf16.mxu0 0
        %927 = vmatpush1.bf16.msra.mxu0 %v860
        %928 = vmatprep.subr.bf16.mxu0 0
        %929 = vmatpush1.bf16.msra.mxu0 %v861
        %930 = vmatprep.subr.bf16.mxu0 0
        %931 = vmatpush1.bf16.msra.mxu0 %v862
        %932 = vmatprep.subr.bf16.mxu0 0
        %933 = vmatpush1.bf16.msra.mxu0 %v863
        %934 = vmatprep.subr.bf16.mxu0 0
        %935 = vmatpush1.bf16.msra.mxu0 %v864
        %936 = vmatprep.subr.bf16.mxu0 0
        %937 = vmatpush1.bf16.msra.mxu0 %v865
        %938 = vmatprep.subr.bf16.mxu0 0
        %939 = vmatpush1.bf16.msra.mxu0 %v866
        %940 = vmatprep.subr.bf16.mxu0 0
        %941 = vmatpush1.bf16.msra.mxu0 %v867
        %942 = vmatprep.subr.bf16.mxu0 0
        %943 = vmatpush1.bf16.msra.mxu0 %v868
        %944 = vmatprep.subr.bf16.mxu0 0
        %945 = vmatpush1.bf16.msra.mxu0 %v869
        %946 = vmatprep.subr.bf16.mxu0 0
        %947 = vmatpush1.bf16.msra.mxu0 %v870
        %948 = vmatprep.subr.bf16.mxu0 0
        %949 = vmatpush1.bf16.msra.mxu0 %v871
        %950 = vmatprep.subr.bf16.mxu0 0
        %951 = vmatpush1.bf16.msra.mxu0 %v872
        %952 = vmatprep.subr.bf16.mxu0 0
        %953 = vmatpush1.bf16.msra.mxu0 %v873
        %954 = vmatprep.mubr.bf16.mxu0 %v723
        %955 = vmatmul.mubr.bf16.gmra.mrb[0].mxu0 %v722
        %v956 = vpop.f32.mrb[0].mxu0
        %v957 = vadd.f32 %v708, %v956
        %v958 = vpop.f32.mrb[0].mxu0
        %v959 = vpop.f32.mrb[0].mxu0
        %v960 = vadd.f32 %v708, %v959
        %v961 = vpop.f32.mrb[0].mxu0
        %962 = vdwg.mxu0
        %963 = vmatprep.subr.bf16.mxu0 0
        %964 = vmatpush1.bf16.msra.mxu0 %v874
        %965 = vmatprep.subr.bf16.mxu0 0
        %966 = vmatpush1.bf16.msra.mxu0 %v875
        %967 = vmatprep.subr.bf16.mxu0 0
        %968 = vmatpush1.bf16.msra.mxu0 %v876
        %969 = vmatprep.subr.bf16.mxu0 0
        %970 = vmatpush1.bf16.msra.mxu0 %v877
        %971 = vmatprep.subr.bf16.mxu0 0
        %972 = vmatpush1.bf16.msra.mxu0 %v878
        %973 = vmatprep.subr.bf16.mxu0 0
        %974 = vmatpush1.bf16.msra.mxu0 %v879
        %975 = vmatprep.subr.bf16.mxu0 0
        %976 = vmatpush1.bf16.msra.mxu0 %v880
        %977 = vmatprep.subr.bf16.mxu0 0
        %978 = vmatpush1.bf16.msra.mxu0 %v881
        %979 = vmatprep.subr.bf16.mxu0 0
        %980 = vmatpush1.bf16.msra.mxu0 %v882
        %981 = vmatprep.subr.bf16.mxu0 0
        %982 = vmatpush1.bf16.msra.mxu0 %v883
        %983 = vmatprep.subr.bf16.mxu0 0
        %984 = vmatpush1.bf16.msra.mxu0 %v884
        %985 = vmatprep.subr.bf16.mxu0 0
        %986 = vmatpush1.bf16.msra.mxu0 %v885
        %987 = vmatprep.subr.bf16.mxu0 0
        %988 = vmatpush1.bf16.msra.mxu0 %v886
        %989 = vmatprep.subr.bf16.mxu0 0
        %990 = vmatpush1.bf16.msra.mxu0 %v887
        %991 = vmatprep.subr.bf16.mxu0 0
        %992 = vmatpush1.bf16.msra.mxu0 %v888
        %993 = vmatprep.subr.bf16.mxu0 0
        %994 = vmatpush1.bf16.msra.mxu0 %v889
        %995 = vmatprep.mubr.bf16.mxu0 %v725
        %996 = vmatmul.mubr.bf16.gmra.mrb[0].mxu0 %v724
        %v997 = vpop.f32.mrb[0].mxu0
        %v998 = vadd.f32 %v957, %v997
        %v999 = vpop.f32.mrb[0].mxu0
        %v1000 = vpop.f32.mrb[0].mxu0
        %v1001 = vadd.f32 %v960, %v1000
        %v1002 = vpop.f32.mrb[0].mxu0
        %1003 = vdwg.mxu0
        %1004 = vst [vmem:[%s246 + $0x8] sm:$0xff] %v998
        %1005 = vst [vmem:[%s246 + $0x28] sm:$0xff] %v1001
        %v1006 = vld [vmem:[%s217 + $0x20] sm:$0xff]
        %v1007 = vld [vmem:[%s217 + $0x28] sm:$0xff]
        %v1008 = vld [vmem:[%s217 + $0x60] sm:$0xff]
        %v1009 = vld [vmem:[%s217 + $0x68] sm:$0xff]
        %s1010 = scalar_lea.vmem %s253, 512
        %v1011 = vld [vmem:[%s1010] sm:$0xf]
        %v1012 = vld [vmem:[%s1010 + $0x4] sm:$0xf]
        %v1013 = vld [vmem:[%s1010 + $0x8] sm:$0xf]
        %v1014 = vld [vmem:[%s1010 + $0xc] sm:$0xf]
        %v1015 = vld [vmem:[%s1010 + $0x10] sm:$0xf]
        %v1016 = vld [vmem:[%s1010 + $0x14] sm:$0xf]
        %v1017 = vld [vmem:[%s1010 + $0x18] sm:$0xf]
        %v1018 = vld [vmem:[%s1010 + $0x1c] sm:$0xf]
        %v1019 = vld [vmem:[%s1010 + $0x20] sm:$0xf]
        %v1020 = vld [vmem:[%s1010 + $0x24] sm:$0xf]
        %v1021 = vld [vmem:[%s1010 + $0x28] sm:$0xf]
        %v1022 = vld [vmem:[%s1010 + $0x2c] sm:$0xf]
        %v1023 = vld [vmem:[%s1010 + $0x30] sm:$0xf]
        %v1024 = vld [vmem:[%s1010 + $0x34] sm:$0xf]
        %v1025 = vld [vmem:[%s1010 + $0x38] sm:$0xf]
        %v1026 = vld [vmem:[%s1010 + $0x3c] sm:$0xf]
        %v1027 = vld [vmem:[%s1010 + $0x40] sm:$0xf]
        %v1028 = vld [vmem:[%s1010 + $0x44] sm:$0xf]
        %v1029 = vld [vmem:[%s1010 + $0x48] sm:$0xf]
        %v1030 = vld [vmem:[%s1010 + $0x4c] sm:$0xf]
        %v1031 = vld [vmem:[%s1010 + $0x50] sm:$0xf]
        %v1032 = vld [vmem:[%s1010 + $0x54] sm:$0xf]
        %v1033 = vld [vmem:[%s1010 + $0x58] sm:$0xf]
        %v1034 = vld [vmem:[%s1010 + $0x5c] sm:$0xf]
        %v1035 = vld [vmem:[%s1010 + $0x60] sm:$0xf]
        %v1036 = vld [vmem:[%s1010 + $0x64] sm:$0xf]
        %v1037 = vld [vmem:[%s1010 + $0x68] sm:$0xf]
        %v1038 = vld [vmem:[%s1010 + $0x6c] sm:$0xf]
        %v1039 = vld [vmem:[%s1010 + $0x70] sm:$0xf]
        %v1040 = vld [vmem:[%s1010 + $0x74] sm:$0xf]
        %v1041 = vld [vmem:[%s1010 + $0x78] sm:$0xf]
        %v1042 = vld [vmem:[%s1010 + $0x7c] sm:$0xf]
        %v1043 = vld [vmem:[%s1010 + $0x80] sm:$0xf]
        %v1044 = vld [vmem:[%s1010 + $0x84] sm:$0xf]
        %v1045 = vld [vmem:[%s1010 + $0x88] sm:$0xf]
        %v1046 = vld [vmem:[%s1010 + $0x8c] sm:$0xf]
        %v1047 = vld [vmem:[%s1010 + $0x90] sm:$0xf]
        %v1048 = vld [vmem:[%s1010 + $0x94] sm:$0xf]
        %v1049 = vld [vmem:[%s1010 + $0x98] sm:$0xf]
        %v1050 = vld [vmem:[%s1010 + $0x9c] sm:$0xf]
        %v1051 = vld [vmem:[%s1010 + $0xa0] sm:$0xf]
        %v1052 = vld [vmem:[%s1010 + $0xa4] sm:$0xf]
        %v1053 = vld [vmem:[%s1010 + $0xa8] sm:$0xf]
        %v1054 = vld [vmem:[%s1010 + $0xac] sm:$0xf]
        %v1055 = vld [vmem:[%s1010 + $0xb0] sm:$0xf]
        %v1056 = vld [vmem:[%s1010 + $0xb4] sm:$0xf]
        %v1057 = vld [vmem:[%s1010 + $0xb8] sm:$0xf]
        %v1058 = vld [vmem:[%s1010 + $0xbc] sm:$0xf]
        %v1059 = vld [vmem:[%s1010 + $0xc0] sm:$0xf]
        %v1060 = vld [vmem:[%s1010 + $0xc4] sm:$0xf]
        %v1061 = vld [vmem:[%s1010 + $0xc8] sm:$0xf]
        %v1062 = vld [vmem:[%s1010 + $0xcc] sm:$0xf]
        %v1063 = vld [vmem:[%s1010 + $0xd0] sm:$0xf]
        %v1064 = vld [vmem:[%s1010 + $0xd4] sm:$0xf]
        %v1065 = vld [vmem:[%s1010 + $0xd8] sm:$0xf]
        %v1066 = vld [vmem:[%s1010 + $0xdc] sm:$0xf]
        %v1067 = vld [vmem:[%s1010 + $0xe0] sm:$0xf]
        %v1068 = vld [vmem:[%s1010 + $0xe4] sm:$0xf]
        %v1069 = vld [vmem:[%s1010 + $0xe8] sm:$0xf]
        %v1070 = vld [vmem:[%s1010 + $0xec] sm:$0xf]
        %v1071 = vld [vmem:[%s1010 + $0xf0] sm:$0xf]
        %v1072 = vld [vmem:[%s1010 + $0xf4] sm:$0xf]
        %v1073 = vld [vmem:[%s1010 + $0xf8] sm:$0xf]
        %v1074 = vld [vmem:[%s1010 + $0xfc] sm:$0xf]
        %s1075 = scalar_lea.vmem %s258, 2
        %v1076 = vld [vmem:[%s1075] sm:$0x1]
        %v1078 = vlaneseq
        %v1079 = vshrl.u32 %v1078, 7
        %v1080 = vsub.s32 0, %v1079
        %v1081 = vrot.slane %v1076, %v1080
        %v1087 = vunpack.c.l.b16 %v1006
        %v1088 = vunpack.c.h.b16 %v1006
        %v1089 = vunpack.c.l.b16 %v1007
        %v1090 = vunpack.c.h.b16 %v1007
        %v1091 = vunpack.c.l.b16 %v1008
        %v1092 = vunpack.c.h.b16 %v1008
        %v1093 = vunpack.c.l.b16 %v1009
        %v1094 = vunpack.c.h.b16 %v1009
        %v1095 = vpack.c.b16 %v1091, %v1087
        %v1096 = vpack.c.b16 %v1092, %v1088
        %v1097 = vpack.c.b16 %v1093, %v1089
        %v1098 = vpack.c.b16 %v1094, %v1090
        %v1167 = vunpack.c.l.b16 %v1011
        %v1168 = vunpack.c.l.b16 %v1012
        %v1169 = vunpack.c.l.b16 %v1013
        %v1170 = vunpack.c.l.b16 %v1014
        %v1171 = vunpack.c.l.b16 %v1015
        %v1172 = vunpack.c.l.b16 %v1016
        %v1173 = vunpack.c.l.b16 %v1017
        %v1174 = vunpack.c.l.b16 %v1018
        %v1175 = vunpack.c.l.b16 %v1019
        %v1176 = vunpack.c.l.b16 %v1020
        %v1177 = vunpack.c.l.b16 %v1021
        %v1178 = vunpack.c.l.b16 %v1022
        %v1179 = vunpack.c.l.b16 %v1023
        %v1180 = vunpack.c.l.b16 %v1024
        %v1181 = vunpack.c.l.b16 %v1025
        %v1182 = vunpack.c.l.b16 %v1026
        %v1183 = vunpack.c.l.b16 %v1027
        %v1184 = vunpack.c.l.b16 %v1028
        %v1185 = vunpack.c.l.b16 %v1029
        %v1186 = vunpack.c.l.b16 %v1030
        %v1187 = vunpack.c.l.b16 %v1031
        %v1188 = vunpack.c.l.b16 %v1032
        %v1189 = vunpack.c.l.b16 %v1033
        %v1190 = vunpack.c.l.b16 %v1034
        %v1191 = vunpack.c.l.b16 %v1035
        %v1192 = vunpack.c.l.b16 %v1036
        %v1193 = vunpack.c.l.b16 %v1037
        %v1194 = vunpack.c.l.b16 %v1038
        %v1195 = vunpack.c.l.b16 %v1039
        %v1196 = vunpack.c.l.b16 %v1040
        %v1197 = vunpack.c.l.b16 %v1041
        %v1198 = vunpack.c.l.b16 %v1042
        %v1199 = vunpack.c.l.b16 %v1043
        %v1200 = vunpack.c.l.b16 %v1044
        %v1201 = vunpack.c.l.b16 %v1045
        %v1202 = vunpack.c.l.b16 %v1046
        %v1203 = vunpack.c.l.b16 %v1047
        %v1204 = vunpack.c.l.b16 %v1048
        %v1205 = vunpack.c.l.b16 %v1049
        %v1206 = vunpack.c.l.b16 %v1050
        %v1207 = vunpack.c.l.b16 %v1051
        %v1208 = vunpack.c.l.b16 %v1052
        %v1209 = vunpack.c.l.b16 %v1053
        %v1210 = vunpack.c.l.b16 %v1054
        %v1211 = vunpack.c.l.b16 %v1055
        %v1212 = vunpack.c.l.b16 %v1056
        %v1213 = vunpack.c.l.b16 %v1057
        %v1214 = vunpack.c.l.b16 %v1058
        %v1215 = vunpack.c.l.b16 %v1059
        %v1216 = vunpack.c.l.b16 %v1060
        %v1217 = vunpack.c.l.b16 %v1061
        %v1218 = vunpack.c.l.b16 %v1062
        %v1219 = vunpack.c.l.b16 %v1063
        %v1220 = vunpack.c.l.b16 %v1064
        %v1221 = vunpack.c.l.b16 %v1065
        %v1222 = vunpack.c.l.b16 %v1066
        %v1223 = vunpack.c.l.b16 %v1067
        %v1224 = vunpack.c.l.b16 %v1068
        %v1225 = vunpack.c.l.b16 %v1069
        %v1226 = vunpack.c.l.b16 %v1070
        %v1227 = vunpack.c.l.b16 %v1071
        %v1228 = vunpack.c.l.b16 %v1072
        %v1229 = vunpack.c.l.b16 %v1073
        %v1230 = vunpack.c.l.b16 %v1074
        %v1231 = vpack.c.b16 %v1168, %v1167
        %v1232 = vpack.c.b16 %v1170, %v1169
        %v1233 = vpack.c.b16 %v1172, %v1171
        %v1234 = vpack.c.b16 %v1174, %v1173
        %v1235 = vpack.c.b16 %v1176, %v1175
        %v1236 = vpack.c.b16 %v1178, %v1177
        %v1237 = vpack.c.b16 %v1180, %v1179
        %v1238 = vpack.c.b16 %v1182, %v1181
        %v1239 = vpack.c.b16 %v1184, %v1183
        %v1240 = vpack.c.b16 %v1186, %v1185
        %v1241 = vpack.c.b16 %v1188, %v1187
        %v1242 = vpack.c.b16 %v1190, %v1189
        %v1243 = vpack.c.b16 %v1192, %v1191
        %v1244 = vpack.c.b16 %v1194, %v1193
        %v1245 = vpack.c.b16 %v1196, %v1195
        %v1246 = vpack.c.b16 %v1198, %v1197
        %v1247 = vpack.c.b16 %v1200, %v1199
        %v1248 = vpack.c.b16 %v1202, %v1201
        %v1249 = vpack.c.b16 %v1204, %v1203
        %v1250 = vpack.c.b16 %v1206, %v1205
        %v1251 = vpack.c.b16 %v1208, %v1207
        %v1252 = vpack.c.b16 %v1210, %v1209
        %v1253 = vpack.c.b16 %v1212, %v1211
        %v1254 = vpack.c.b16 %v1214, %v1213
        %v1255 = vpack.c.b16 %v1216, %v1215
        %v1256 = vpack.c.b16 %v1218, %v1217
        %v1257 = vpack.c.b16 %v1220, %v1219
        %v1258 = vpack.c.b16 %v1222, %v1221
        %v1259 = vpack.c.b16 %v1224, %v1223
        %v1260 = vpack.c.b16 %v1226, %v1225
        %v1261 = vpack.c.b16 %v1228, %v1227
        %v1262 = vpack.c.b16 %v1230, %v1229
        %1295 = vmatprep.subr.bf16.mxu0 0
        %1296 = vmatpush1.bf16.msra.mxu0 %v1231
        %1297 = vmatprep.subr.bf16.mxu0 0
        %1298 = vmatpush1.bf16.msra.mxu0 %v1232
        %1299 = vmatprep.subr.bf16.mxu0 0
        %1300 = vmatpush1.bf16.msra.mxu0 %v1233
        %1301 = vmatprep.subr.bf16.mxu0 0
        %1302 = vmatpush1.bf16.msra.mxu0 %v1234
        %1303 = vmatprep.subr.bf16.mxu0 0
        %1304 = vmatpush1.bf16.msra.mxu0 %v1235
        %1305 = vmatprep.subr.bf16.mxu0 0
        %1306 = vmatpush1.bf16.msra.mxu0 %v1236
        %1307 = vmatprep.subr.bf16.mxu0 0
        %1308 = vmatpush1.bf16.msra.mxu0 %v1237
        %1309 = vmatprep.subr.bf16.mxu0 0
        %1310 = vmatpush1.bf16.msra.mxu0 %v1238
        %1311 = vmatprep.subr.bf16.mxu0 0
        %1312 = vmatpush1.bf16.msra.mxu0 %v1239
        %1313 = vmatprep.subr.bf16.mxu0 0
        %1314 = vmatpush1.bf16.msra.mxu0 %v1240
        %1315 = vmatprep.subr.bf16.mxu0 0
        %1316 = vmatpush1.bf16.msra.mxu0 %v1241
        %1317 = vmatprep.subr.bf16.mxu0 0
        %1318 = vmatpush1.bf16.msra.mxu0 %v1242
        %1319 = vmatprep.subr.bf16.mxu0 0
        %1320 = vmatpush1.bf16.msra.mxu0 %v1243
        %1321 = vmatprep.subr.bf16.mxu0 0
        %1322 = vmatpush1.bf16.msra.mxu0 %v1244
        %1323 = vmatprep.subr.bf16.mxu0 0
        %1324 = vmatpush1.bf16.msra.mxu0 %v1245
        %1325 = vmatprep.subr.bf16.mxu0 0
        %1326 = vmatpush1.bf16.msra.mxu0 %v1246
        %1327 = vmatprep.mubr.bf16.mxu0 %v1096
        %1328 = vmatmul.mubr.bf16.gmra.mrb[0].mxu0 %v1095
        %v1329 = vpop.f32.mrb[0].mxu0
        %v1330 = vadd.f32 %v1081, %v1329
        %v1331 = vpop.f32.mrb[0].mxu0
        %v1332 = vpop.f32.mrb[0].mxu0
        %v1333 = vadd.f32 %v1081, %v1332
        %v1334 = vpop.f32.mrb[0].mxu0
        %1335 = vdwg.mxu0
        %1336 = vmatprep.subr.bf16.mxu0 0
        %1337 = vmatpush1.bf16.msra.mxu0 %v1247
        %1338 = vmatprep.subr.bf16.mxu0 0
        %1339 = vmatpush1.bf16.msra.mxu0 %v1248
        %1340 = vmatprep.subr.bf16.mxu0 0
        %1341 = vmatpush1.bf16.msra.mxu0 %v1249
        %1342 = vmatprep.subr.bf16.mxu0 0
        %1343 = vmatpush1.bf16.msra.mxu0 %v1250
        %1344 = vmatprep.subr.bf16.mxu0 0
        %1345 = vmatpush1.bf16.msra.mxu0 %v1251
        %1346 = vmatprep.subr.bf16.mxu0 0
        %1347 = vmatpush1.bf16.msra.mxu0 %v1252
        %1348 = vmatprep.subr.bf16.mxu0 0
        %1349 = vmatpush1.bf16.msra.mxu0 %v1253
        %1350 = vmatprep.subr.bf16.mxu0 0
        %1351 = vmatpush1.bf16.msra.mxu0 %v1254
        %1352 = vmatprep.subr.bf16.mxu0 0
        %1353 = vmatpush1.bf16.msra.mxu0 %v1255
        %1354 = vmatprep.subr.bf16.mxu0 0
        %1355 = vmatpush1.bf16.msra.mxu0 %v1256
        %1356 = vmatprep.subr.bf16.mxu0 0
        %1357 = vmatpush1.bf16.msra.mxu0 %v1257
        %1358 = vmatprep.subr.bf16.mxu0 0
        %1359 = vmatpush1.bf16.msra.mxu0 %v1258
        %1360 = vmatprep.subr.bf16.mxu0 0
        %1361 = vmatpush1.bf16.msra.mxu0 %v1259
        %1362 = vmatprep.subr.bf16.mxu0 0
        %1363 = vmatpush1.bf16.msra.mxu0 %v1260
        %1364 = vmatprep.subr.bf16.mxu0 0
        %1365 = vmatpush1.bf16.msra.mxu0 %v1261
        %1366 = vmatprep.subr.bf16.mxu0 0
        %1367 = vmatpush1.bf16.msra.mxu0 %v1262
        %1368 = vmatprep.mubr.bf16.mxu0 %v1098
        %1369 = vmatmul.mubr.bf16.gmra.mrb[0].mxu0 %v1097
        %v1370 = vpop.f32.mrb[0].mxu0
        %v1371 = vadd.f32 %v1330, %v1370
        %v1372 = vpop.f32.mrb[0].mxu0
        %v1373 = vpop.f32.mrb[0].mxu0
        %v1374 = vadd.f32 %v1333, %v1373
        %v1375 = vpop.f32.mrb[0].mxu0
        %1376 = vdwg.mxu0
        %1377 = vst [vmem:[%s246 + $0x10] sm:$0xff] %v1371
        %1378 = vst [vmem:[%s246 + $0x30] sm:$0xff] %v1374
        %v1379 = vld [vmem:[%s217 + $0x30] sm:$0xff]
        %v1380 = vld [vmem:[%s217 + $0x38] sm:$0xff]
        %v1381 = vld [vmem:[%s217 + $0x70] sm:$0xff]
        %v1382 = vld [vmem:[%s217 + $0x78] sm:$0xff]
        %s1383 = scalar_lea.vmem %s253, 768
        %v1384 = vld [vmem:[%s1383] sm:$0xf]
        %v1385 = vld [vmem:[%s1383 + $0x4] sm:$0xf]
        %v1386 = vld [vmem:[%s1383 + $0x8] sm:$0xf]
        %v1387 = vld [vmem:[%s1383 + $0xc] sm:$0xf]
        %v1388 = vld [vmem:[%s1383 + $0x10] sm:$0xf]
        %v1389 = vld [vmem:[%s1383 + $0x14] sm:$0xf]
        %v1390 = vld [vmem:[%s1383 + $0x18] sm:$0xf]
        %v1391 = vld [vmem:[%s1383 + $0x1c] sm:$0xf]
        %v1392 = vld [vmem:[%s1383 + $0x20] sm:$0xf]
        %v1393 = vld [vmem:[%s1383 + $0x24] sm:$0xf]
        %v1394 = vld [vmem:[%s1383 + $0x28] sm:$0xf]
        %v1395 = vld [vmem:[%s1383 + $0x2c] sm:$0xf]
        %v1396 = vld [vmem:[%s1383 + $0x30] sm:$0xf]
        %v1397 = vld [vmem:[%s1383 + $0x34] sm:$0xf]
        %v1398 = vld [vmem:[%s1383 + $0x38] sm:$0xf]
        %v1399 = vld [vmem:[%s1383 + $0x3c] sm:$0xf]
        %v1400 = vld [vmem:[%s1383 + $0x40] sm:$0xf]
        %v1401 = vld [vmem:[%s1383 + $0x44] sm:$0xf]
        %v1402 = vld [vmem:[%s1383 + $0x48] sm:$0xf]
        %v1403 = vld [vmem:[%s1383 + $0x4c] sm:$0xf]
        %v1404 = vld [vmem:[%s1383 + $0x50] sm:$0xf]
        %v1405 = vld [vmem:[%s1383 + $0x54] sm:$0xf]
        %v1406 = vld [vmem:[%s1383 + $0x58] sm:$0xf]
        %v1407 = vld [vmem:[%s1383 + $0x5c] sm:$0xf]
        %v1408 = vld [vmem:[%s1383 + $0x60] sm:$0xf]
        %v1409 = vld [vmem:[%s1383 + $0x64] sm:$0xf]
        %v1410 = vld [vmem:[%s1383 + $0x68] sm:$0xf]
        %v1411 = vld [vmem:[%s1383 + $0x6c] sm:$0xf]
        %v1412 = vld [vmem:[%s1383 + $0x70] sm:$0xf]
        %v1413 = vld [vmem:[%s1383 + $0x74] sm:$0xf]
        %v1414 = vld [vmem:[%s1383 + $0x78] sm:$0xf]
        %v1415 = vld [vmem:[%s1383 + $0x7c] sm:$0xf]
        %v1416 = vld [vmem:[%s1383 + $0x80] sm:$0xf]
        %v1417 = vld [vmem:[%s1383 + $0x84] sm:$0xf]
        %v1418 = vld [vmem:[%s1383 + $0x88] sm:$0xf]
        %v1419 = vld [vmem:[%s1383 + $0x8c] sm:$0xf]
        %v1420 = vld [vmem:[%s1383 + $0x90] sm:$0xf]
        %v1421 = vld [vmem:[%s1383 + $0x94] sm:$0xf]
        %v1422 = vld [vmem:[%s1383 + $0x98] sm:$0xf]
        %v1423 = vld [vmem:[%s1383 + $0x9c] sm:$0xf]
        %v1424 = vld [vmem:[%s1383 + $0xa0] sm:$0xf]
        %v1425 = vld [vmem:[%s1383 + $0xa4] sm:$0xf]
        %v1426 = vld [vmem:[%s1383 + $0xa8] sm:$0xf]
        %v1427 = vld [vmem:[%s1383 + $0xac] sm:$0xf]
        %v1428 = vld [vmem:[%s1383 + $0xb0] sm:$0xf]
        %v1429 = vld [vmem:[%s1383 + $0xb4] sm:$0xf]
        %v1430 = vld [vmem:[%s1383 + $0xb8] sm:$0xf]
        %v1431 = vld [vmem:[%s1383 + $0xbc] sm:$0xf]
        %v1432 = vld [vmem:[%s1383 + $0xc0] sm:$0xf]
        %v1433 = vld [vmem:[%s1383 + $0xc4] sm:$0xf]
        %v1434 = vld [vmem:[%s1383 + $0xc8] sm:$0xf]
        %v1435 = vld [vmem:[%s1383 + $0xcc] sm:$0xf]
        %v1436 = vld [vmem:[%s1383 + $0xd0] sm:$0xf]
        %v1437 = vld [vmem:[%s1383 + $0xd4] sm:$0xf]
        %v1438 = vld [vmem:[%s1383 + $0xd8] sm:$0xf]
        %v1439 = vld [vmem:[%s1383 + $0xdc] sm:$0xf]
        %v1440 = vld [vmem:[%s1383 + $0xe0] sm:$0xf]
        %v1441 = vld [vmem:[%s1383 + $0xe4] sm:$0xf]
        %v1442 = vld [vmem:[%s1383 + $0xe8] sm:$0xf]
        %v1443 = vld [vmem:[%s1383 + $0xec] sm:$0xf]
        %v1444 = vld [vmem:[%s1383 + $0xf0] sm:$0xf]
        %v1445 = vld [vmem:[%s1383 + $0xf4] sm:$0xf]
        %v1446 = vld [vmem:[%s1383 + $0xf8] sm:$0xf]
        %v1447 = vld [vmem:[%s1383 + $0xfc] sm:$0xf]
        %s1448 = scalar_lea.vmem %s258, 3
        %v1449 = vld [vmem:[%s1448] sm:$0x1]
        %v1451 = vlaneseq
        %v1452 = vshrl.u32 %v1451, 7
        %v1453 = vsub.s32 0, %v1452
        %v1454 = vrot.slane %v1449, %v1453
        %v1460 = vunpack.c.l.b16 %v1379
        %v1461 = vunpack.c.h.b16 %v1379
        %v1462 = vunpack.c.l.b16 %v1380
        %v1463 = vunpack.c.h.b16 %v1380
        %v1464 = vunpack.c.l.b16 %v1381
        %v1465 = vunpack.c.h.b16 %v1381
        %v1466 = vunpack.c.l.b16 %v1382
        %v1467 = vunpack.c.h.b16 %v1382
        %v1468 = vpack.c.b16 %v1464, %v1460
        %v1469 = vpack.c.b16 %v1465, %v1461
        %v1470 = vpack.c.b16 %v1466, %v1462
        %v1471 = vpack.c.b16 %v1467, %v1463
        %v1540 = vunpack.c.l.b16 %v1384
        %v1541 = vunpack.c.l.b16 %v1385
        %v1542 = vunpack.c.l.b16 %v1386
        %v1543 = vunpack.c.l.b16 %v1387
        %v1544 = vunpack.c.l.b16 %v1388
        %v1545 = vunpack.c.l.b16 %v1389
        %v1546 = vunpack.c.l.b16 %v1390
        %v1547 = vunpack.c.l.b16 %v1391
        %v1548 = vunpack.c.l.b16 %v1392
        %v1549 = vunpack.c.l.b16 %v1393
        %v1550 = vunpack.c.l.b16 %v1394
        %v1551 = vunpack.c.l.b16 %v1395
        %v1552 = vunpack.c.l.b16 %v1396
        %v1553 = vunpack.c.l.b16 %v1397
        %v1554 = vunpack.c.l.b16 %v1398
        %v1555 = vunpack.c.l.b16 %v1399
        %v1556 = vunpack.c.l.b16 %v1400
        %v1557 = vunpack.c.l.b16 %v1401
        %v1558 = vunpack.c.l.b16 %v1402
        %v1559 = vunpack.c.l.b16 %v1403
        %v1560 = vunpack.c.l.b16 %v1404
        %v1561 = vunpack.c.l.b16 %v1405
        %v1562 = vunpack.c.l.b16 %v1406
        %v1563 = vunpack.c.l.b16 %v1407
        %v1564 = vunpack.c.l.b16 %v1408
        %v1565 = vunpack.c.l.b16 %v1409
        %v1566 = vunpack.c.l.b16 %v1410
        %v1567 = vunpack.c.l.b16 %v1411
        %v1568 = vunpack.c.l.b16 %v1412
        %v1569 = vunpack.c.l.b16 %v1413
        %v1570 = vunpack.c.l.b16 %v1414
        %v1571 = vunpack.c.l.b16 %v1415
        %v1572 = vunpack.c.l.b16 %v1416
        %v1573 = vunpack.c.l.b16 %v1417
        %v1574 = vunpack.c.l.b16 %v1418
        %v1575 = vunpack.c.l.b16 %v1419
        %v1576 = vunpack.c.l.b16 %v1420
        %v1577 = vunpack.c.l.b16 %v1421
        %v1578 = vunpack.c.l.b16 %v1422
        %v1579 = vunpack.c.l.b16 %v1423
        %v1580 = vunpack.c.l.b16 %v1424
        %v1581 = vunpack.c.l.b16 %v1425
        %v1582 = vunpack.c.l.b16 %v1426
        %v1583 = vunpack.c.l.b16 %v1427
        %v1584 = vunpack.c.l.b16 %v1428
        %v1585 = vunpack.c.l.b16 %v1429
        %v1586 = vunpack.c.l.b16 %v1430
        %v1587 = vunpack.c.l.b16 %v1431
        %v1588 = vunpack.c.l.b16 %v1432
        %v1589 = vunpack.c.l.b16 %v1433
        %v1590 = vunpack.c.l.b16 %v1434
        %v1591 = vunpack.c.l.b16 %v1435
        %v1592 = vunpack.c.l.b16 %v1436
        %v1593 = vunpack.c.l.b16 %v1437
        %v1594 = vunpack.c.l.b16 %v1438
        %v1595 = vunpack.c.l.b16 %v1439
        %v1596 = vunpack.c.l.b16 %v1440
        %v1597 = vunpack.c.l.b16 %v1441
        %v1598 = vunpack.c.l.b16 %v1442
        %v1599 = vunpack.c.l.b16 %v1443
        %v1600 = vunpack.c.l.b16 %v1444
        %v1601 = vunpack.c.l.b16 %v1445
        %v1602 = vunpack.c.l.b16 %v1446
        %v1603 = vunpack.c.l.b16 %v1447
        %v1604 = vpack.c.b16 %v1541, %v1540
        %v1605 = vpack.c.b16 %v1543, %v1542
        %v1606 = vpack.c.b16 %v1545, %v1544
        %v1607 = vpack.c.b16 %v1547, %v1546
        %v1608 = vpack.c.b16 %v1549, %v1548
        %v1609 = vpack.c.b16 %v1551, %v1550
        %v1610 = vpack.c.b16 %v1553, %v1552
        %v1611 = vpack.c.b16 %v1555, %v1554
        %v1612 = vpack.c.b16 %v1557, %v1556
        %v1613 = vpack.c.b16 %v1559, %v1558
        %v1614 = vpack.c.b16 %v1561, %v1560
        %v1615 = vpack.c.b16 %v1563, %v1562
        %v1616 = vpack.c.b16 %v1565, %v1564
        %v1617 = vpack.c.b16 %v1567, %v1566
        %v1618 = vpack.c.b16 %v1569, %v1568
        %v1619 = vpack.c.b16 %v1571, %v1570
        %v1620 = vpack.c.b16 %v1573, %v1572
        %v1621 = vpack.c.b16 %v1575, %v1574
        %v1622 = vpack.c.b16 %v1577, %v1576
        %v1623 = vpack.c.b16 %v1579, %v1578
        %v1624 = vpack.c.b16 %v1581, %v1580
        %v1625 = vpack.c.b16 %v1583, %v1582
        %v1626 = vpack.c.b16 %v1585, %v1584
        %v1627 = vpack.c.b16 %v1587, %v1586
        %v1628 = vpack.c.b16 %v1589, %v1588
        %v1629 = vpack.c.b16 %v1591, %v1590
        %v1630 = vpack.c.b16 %v1593, %v1592
        %v1631 = vpack.c.b16 %v1595, %v1594
        %v1632 = vpack.c.b16 %v1597, %v1596
        %v1633 = vpack.c.b16 %v1599, %v1598
        %v1634 = vpack.c.b16 %v1601, %v1600
        %v1635 = vpack.c.b16 %v1603, %v1602
        %1668 = vmatprep.subr.bf16.mxu0 0
        %1669 = vmatpush1.bf16.msra.mxu0 %v1604
        %1670 = vmatprep.subr.bf16.mxu0 0
        %1671 = vmatpush1.bf16.msra.mxu0 %v1605
        %1672 = vmatprep.subr.bf16.mxu0 0
        %1673 = vmatpush1.bf16.msra.mxu0 %v1606
        %1674 = vmatprep.subr.bf16.mxu0 0
        %1675 = vmatpush1.bf16.msra.mxu0 %v1607
        %1676 = vmatprep.subr.bf16.mxu0 0
        %1677 = vmatpush1.bf16.msra.mxu0 %v1608
        %1678 = vmatprep.subr.bf16.mxu0 0
        %1679 = vmatpush1.bf16.msra.mxu0 %v1609
        %1680 = vmatprep.subr.bf16.mxu0 0
        %1681 = vmatpush1.bf16.msra.mxu0 %v1610
        %1682 = vmatprep.subr.bf16.mxu0 0
        %1683 = vmatpush1.bf16.msra.mxu0 %v1611
        %1684 = vmatprep.subr.bf16.mxu0 0
        %1685 = vmatpush1.bf16.msra.mxu0 %v1612
        %1686 = vmatprep.subr.bf16.mxu0 0
        %1687 = vmatpush1.bf16.msra.mxu0 %v1613
        %1688 = vmatprep.subr.bf16.mxu0 0
        %1689 = vmatpush1.bf16.msra.mxu0 %v1614
        %1690 = vmatprep.subr.bf16.mxu0 0
        %1691 = vmatpush1.bf16.msra.mxu0 %v1615
        %1692 = vmatprep.subr.bf16.mxu0 0
        %1693 = vmatpush1.bf16.msra.mxu0 %v1616
        %1694 = vmatprep.subr.bf16.mxu0 0
        %1695 = vmatpush1.bf16.msra.mxu0 %v1617
        %1696 = vmatprep.subr.bf16.mxu0 0
        %1697 = vmatpush1.bf16.msra.mxu0 %v1618
        %1698 = vmatprep.subr.bf16.mxu0 0
        %1699 = vmatpush1.bf16.msra.mxu0 %v1619
        %1700 = vmatprep.mubr.bf16.mxu0 %v1469
        %1701 = vmatmul.mubr.bf16.gmra.mrb[0].mxu0 %v1468
        %v1702 = vpop.f32.mrb[0].mxu0
        %v1703 = vadd.f32 %v1454, %v1702
        %v1704 = vpop.f32.mrb[0].mxu0
        %v1705 = vpop.f32.mrb[0].mxu0
        %v1706 = vadd.f32 %v1454, %v1705
        %v1707 = vpop.f32.mrb[0].mxu0
        %1708 = vdwg.mxu0
        %1709 = vmatprep.subr.bf16.mxu0 0
        %1710 = vmatpush1.bf16.msra.mxu0 %v1620
        %1711 = vmatprep.subr.bf16.mxu0 0
        %1712 = vmatpush1.bf16.msra.mxu0 %v1621
        %1713 = vmatprep.subr.bf16.mxu0 0
        %1714 = vmatpush1.bf16.msra.mxu0 %v1622
        %1715 = vmatprep.subr.bf16.mxu0 0
        %1716 = vmatpush1.bf16.msra.mxu0 %v1623
        %1717 = vmatprep.subr.bf16.mxu0 0
        %1718 = vmatpush1.bf16.msra.mxu0 %v1624
        %1719 = vmatprep.subr.bf16.mxu0 0
        %1720 = vmatpush1.bf16.msra.mxu0 %v1625
        %1721 = vmatprep.subr.bf16.mxu0 0
        %1722 = vmatpush1.bf16.msra.mxu0 %v1626
        %1723 = vmatprep.subr.bf16.mxu0 0
        %1724 = vmatpush1.bf16.msra.mxu0 %v1627
        %1725 = vmatprep.subr.bf16.mxu0 0
        %1726 = vmatpush1.bf16.msra.mxu0 %v1628
        %1727 = vmatprep.subr.bf16.mxu0 0
        %1728 = vmatpush1.bf16.msra.mxu0 %v1629
        %1729 = vmatprep.subr.bf16.mxu0 0
        %1730 = vmatpush1.bf16.msra.mxu0 %v1630
        %1731 = vmatprep.subr.bf16.mxu0 0
        %1732 = vmatpush1.bf16.msra.mxu0 %v1631
        %1733 = vmatprep.subr.bf16.mxu0 0
        %1734 = vmatpush1.bf16.msra.mxu0 %v1632
        %1735 = vmatprep.subr.bf16.mxu0 0
        %1736 = vmatpush1.bf16.msra.mxu0 %v1633
        %1737 = vmatprep.subr.bf16.mxu0 0
        %1738 = vmatpush1.bf16.msra.mxu0 %v1634
        %1739 = vmatprep.subr.bf16.mxu0 0
        %1740 = vmatpush1.bf16.msra.mxu0 %v1635
        %1741 = vmatprep.mubr.bf16.mxu0 %v1471
        %1742 = vmatmul.mubr.bf16.gmra.mrb[0].mxu0 %v1470
        %v1743 = vpop.f32.mrb[0].mxu0
        %v1744 = vadd.f32 %v1703, %v1743
        %v1745 = vpop.f32.mrb[0].mxu0
        %v1746 = vpop.f32.mrb[0].mxu0
        %v1747 = vadd.f32 %v1706, %v1746
        %v1748 = vpop.f32.mrb[0].mxu0
        %1749 = vdwg.mxu0
        %1750 = vst [vmem:[%s246 + $0x18] sm:$0xff] %v1744
        %1751 = vst [vmem:[%s246 + $0x38] sm:$0xff] %v1747
        %s1752 = sand.u32 %s100, 1
        %s1753 = sand.u32 %s100, 1
        %s1754 = smul.addr %s1753, 64
        %s1755 = scalar_lea.vmem [#allocation3], %s1754
        // Predicated region
        $region56: #{plate_classifier_forward.1} parent=50 // pred_check
          %p1756 = pneg %p110
        $region57: #{plate_classifier_forward.1} parent=50 // pred_check_branch
          %1758 = sbr.rel (%p1756) target = $region59
        $region58: #{plate_classifier_forward.1} parent=50 // pred_region
          %s1759 = smul.u32 4, %s14
          %s1760 = smul.addr %s1759, 8
          %s1761 = scalar_lea.vmem %s3, %s1760
          // Predicated region
          $region60: #{plate_classifier_forward.1} parent=58 // pred_check
            _
          $region61: #{plate_classifier_forward.1} parent=58 // pred_check_branch
            %1763 = sbr.rel (0) target = $region63
          $region62: #{plate_classifier_forward.1} parent=58 // pred_region
            // Predicated region
            $region64: #{plate_classifier_forward.1} parent=62 // pred_check
              _
            $region65: #{plate_classifier_forward.1} parent=62 // pred_check_branch
              %1765 = sbr.rel (0) target = $region67
            $region66: #{plate_classifier_forward.1} parent=62 // pred_region
              loop: start=0, step=1, limit=1
              $region68: #{plate_classifier_forward.1} parent=66 // loop_pre_header
                _
              $region69: #{plate_classifier_forward.1} parent=66 // loop_header
                %s1767 = sphi 0, %s1771
                %p1768 = scmp.ge.s32.totalorder %s1767, 1
                %s1772 = sphi %s1755, %s1755
                %s1773 = sphi %s1761, %s1761
              $region70: #{plate_classifier_forward.1} parent=66 // loop_header_branch
                %1770 = sbr.rel (%p1768) target = $region74
              $region71: #{plate_classifier_forward.1} parent=66 // loop_body
                %v1774 = vld [vmem:[%s1772] sm:$0xff]
                %1775 = vst [vmem:[%s1773] sm:$0xff] %v1774
                %v1776 = vld [vmem:[%s1772 + $0x8] sm:$0xff]
                %1777 = vst [vmem:[%s1773 + $0x8] sm:$0xff] %v1776
                %v1778 = vld [vmem:[%s1772 + $0x10] sm:$0xff]
                %1779 = vst [vmem:[%s1773 + $0x10] sm:$0xff] %v1778
                %v1780 = vld [vmem:[%s1772 + $0x18] sm:$0xff]
                %1781 = vst [vmem:[%s1773 + $0x18] sm:$0xff] %v1780
                %v1782 = vld [vmem:[%s1772 + $0x20] sm:$0xff]
                %1783 = vst [vmem:[%s1773 + $0x40] sm:$0xff] %v1782
                %v1784 = vld [vmem:[%s1772 + $0x28] sm:$0xff]
                %1785 = vst [vmem:[%s1773 + $0x48] sm:$0xff] %v1784
                %v1786 = vld [vmem:[%s1772 + $0x30] sm:$0xff]
                %1787 = vst [vmem:[%s1773 + $0x50] sm:$0xff] %v1786
                %v1788 = vld [vmem:[%s1772 + $0x38] sm:$0xff]
                %1789 = vst [vmem:[%s1773 + $0x58] sm:$0xff] %v1788
              $region72: #{plate_classifier_forward.1} parent=66 // loop_footer
                %s1771 = sadd.s32 1, %s1767
              $region73: #{plate_classifier_forward.1} parent=66 // loop_footer_branch
                %1766 = sbr.rel target = $region69
              $region74: #{plate_classifier_forward.1} parent=66 // loop_exit
                _
            $region67: #{plate_classifier_forward.1} parent=62 // pred_fallthru
              _
            // Predicated region
            $region75: #{plate_classifier_forward.1} parent=62 // pred_check
              _
            $region76: #{plate_classifier_forward.1} parent=62 // pred_check_branch
              %1791 = sbr.rel target = $region78
            $region77: #{plate_classifier_forward.1} parent=62 // pred_region
              _
            $region78: #{plate_classifier_forward.1} parent=62 // pred_fallthru
              _
          $region63: #{plate_classifier_forward.1} parent=58 // pred_fallthru
            _
          %1792 = vnop
        $region59: #{plate_classifier_forward.1} parent=50 // pred_fallthru
          _
      $region51: #{plate_classifier_forward.1} parent=5 // pred_fallthru
        _
      %p1793 = scmp.le.s32.totalorder 2, %s9
      // Predicated region
      $region79: #{plate_classifier_forward.1} parent=5 // pred_check
        %p1794 = pneg %p1793
      $region80: #{plate_classifier_forward.1} parent=5 // pred_check_branch
        %1796 = sbr.rel (%p1794) target = $region82
      $region81: #{plate_classifier_forward.1} parent=5 // pred_region
        %s1797 = ssub.s32 %s9, 2
        // Predicated region
        $region83: #{plate_classifier_forward.1} parent=81 // pred_check
          %p1798 = pneg %p116
        $region84: #{plate_classifier_forward.1} parent=81 // pred_check_branch
          %1800 = sbr.rel (%p1798) target = $region86
        $region85: #{plate_classifier_forward.1} parent=81 // pred_region
          %s1801 = sand.u32 %s101, 1
          %s1802 = sand.u32 %s101, 1
          %s1803 = smul.addr %s1802, 64
          %s1804 = scalar_lea.vmem [#allocation3], %s1803
        $region86: #{plate_classifier_forward.1} parent=81 // pred_fallthru
          _
      $region82: #{plate_classifier_forward.1} parent=5 // pred_fallthru
        _
    $region6: #{plate_classifier_forward.1} parent=1 // loop_footer
      %s13 = sadd.s32 1, %s9
    $region7: #{plate_classifier_forward.1} parent=1 // loop_footer_branch
      %8 = sbr.rel target = $region3
    $region8: #{plate_classifier_forward.1} parent=1 // loop_exit
      _

</llo_original>
